<compile_context>
chip_gen: v6e
topology: v6e:2x2x1
jax: 0.10.0
libtpu: 0.0.40
codegen_flags: <defaults>
</compile_context>

<pallas_src>
import functools

import jax
import jax.numpy as jnp
import numpy as np
from jax.experimental import pallas as pl
from jax.experimental.pallas import tpu as pltpu

EPS = 1e-5  # PyTorch BatchNorm default eps


# ------------------------------ Pallas kernel ------------------------------ #

def fused_resconv_kernel(xt_ref, xtap_ref, coord_ref,
                         w1t_ref, w2t_ref, w3t_ref, w4t_ref, pv_ref,
                         o_ref, *, h, w):
    """Everything in 'channels x pixels' layout (pixels on the lane axis)."""
    f32 = jnp.float32
    bf16 = jnp.bfloat16
    C = w1t_ref.shape[0]
    R2 = xtap_ref.shape[2]

    def mm(a, b):
        # bf16 MXU operands, f32 accumulation.
        return jnp.dot(a, b, preferred_element_type=f32)

    def elu(y):
        # alpha = 1; exp only on the non-positive branch (no inf intermediates).
        return jnp.where(y > 0, y, jnp.exp(jnp.minimum(y, 0.0)) - 1.0)

    def stats(t):
        # Two-pass training-mode batch stats (biased variance), per channel
        # (sublane) over the pixel/lane axis.
        inv_n = 1.0 / t.shape[1]
        m = jnp.sum(t, axis=1, keepdims=True) * inv_n
        d = t - m
        v = jnp.sum(d * d, axis=1, keepdims=True) * inv_n
        return m, v

    def bn(t, m, v, g, be):
        return (t - m) * jax.lax.rsqrt(v + EPS) * g + be

    # Packed per-stage vectors: one small f32 input instead of 9 tiny refs.
    pv = pv_ref[...]                                     # (4C, 9)
    b1, g1, be1 = pv[:C, 0:1], pv[:C, 1:2], pv[:C, 2:3]
    b2, g2, be2 = pv[:C, 3:4], pv[:C, 4:5], pv[:C, 5:6]
    b34, g3, be3 = pv[:, 6:7], pv[:, 7:8], pv[:, 8:9]

    w1t = w1t_ref[...]                                   # (C, Cin) bf16

    # ---- stage-1 BN statistics over ALL N*H*W positions (un-replicated) ----
    t1s = mm(w1t, xt_ref[...]) + b1                      # (C, R1) f32
    m1, v1 = stats(t1s)
    inv1 = jax.lax.rsqrt(v1 + EPS)

    # Per-output-pixel stencil-centre coordinates (s*ho, s*wo) for the
    # in-kernel padding mask (replaces the old (R2, 9C) f32 mask stream).
    py = coord_ref[0:1, :]                               # (1, R2) int32
    px = coord_ref[1:2, :]

    # ---- stage 1 (taps) + stage-2 3x3 stride-s conv, tap-accumulated ----
    acc = jnp.zeros((C, R2), f32)
    for k in range(9):                                   # static unroll, 9 taps
        dy, dx = k // 3, k % 3
        t1k = mm(w1t, xtap_ref[k]) + b1                  # (C, R2) f32
        y1k = elu((t1k - m1) * inv1 * g1 + be1)
        yy = py + (dy - 1)
        xx = px + (dx - 1)
        valid = (yy >= 0) & (yy < h) & (xx >= 0) & (xx < w)   # (1, R2)
        y1k = jnp.where(valid, y1k, 0.0)                 # zero-padding of y1
        acc = acc + mm(w2t_ref[k], y1k.astype(bf16))     # (C,C)@(C,R2) on MXU
    t2 = acc + b2
    m2, v2 = stats(t2)
    y2 = elu(bn(t2, m2, v2, g2, be2))                    # (C, R2) f32

    # ---- stage 3: 1x1 conv + strided 1x1 shortcut (= centre tap), BN, ELU ----
    z = mm(w3t_ref[...], y2.astype(bf16)) + mm(w4t_ref[...], xtap_ref[4]) + b34
    m3, v3 = stats(z)
    o_ref[...] = elu(bn(z, m3, v3, g3, be3))             # (4C, R2), lane-dense


# --------------------------- Host-side glue -------------------------------- #

def resconv_forward(x_nchw, kp, *, stride, num_out):
    xf = x_nchw.astype(jnp.float32)
    N, Cin, H, W = xf.shape
    C, s = num_out, stride
    Hout = (H + 2 - 3) // s + 1
    Wout = (W + 2 - 3) // s + 1
    R1, R2 = N * H * W, N * Hout * Wout

    # Big activation streams in bf16 (halves HBM->VMEM bytes).
    xt = xf.reshape(N, Cin, H * W).transpose(1, 0, 2).reshape(Cin, R1)
    xt = xt.astype(jnp.bfloat16)                                  # (Cin, R1)

    # Tap-major im2col of x (conv1 is pointwise, so gathering x and recomputing
    # conv1 per tap inside the kernel reproduces the gather of y1).
    xp = jnp.pad(xf, ((0, 0), (0, 0), (1, 1), (1, 1)))
    taps = []
    for dy in range(3):
        for dx in range(3):
            t = xp[:, :, dy:dy + s * (Hout - 1) + 1:s,
                   dx:dx + s * (Wout - 1) + 1:s]                  # (N,Cin,Ho,Wo)
            taps.append(t.transpose(1, 0, 2, 3).reshape(Cin, R2))
    xtap = jnp.stack(taps, axis=0).astype(jnp.bfloat16)           # (9, Cin, R2)

    # Per-pixel (s*ho, s*wo) coordinates for the in-kernel padding mask.
    py = jnp.broadcast_to((s * jnp.arange(Hout, dtype=jnp.int32))[None, :, None],
                          (N, Hout, Wout)).reshape(1, R2)
    px = jnp.broadcast_to((s * jnp.arange(Wout, dtype=jnp.int32))[None, None, :],
                          (N, Hout, Wout)).reshape(1, R2)
    coords = jnp.concatenate([py, px], axis=0)                    # (2, R2) int32

    kernel = functools.partial(fused_resconv_kernel, h=H, w=W)
    vmem = pl.BlockSpec(memory_space=pltpu.MemorySpace.VMEM)
    zt = pl.pallas_call(
        kernel,
        out_shape=jax.ShapeDtypeStruct((4 * C, R2), jnp.float32),
        in_specs=[vmem] * 8,
        out_specs=vmem,
        compiler_params=pltpu.CompilerParams(vmem_limit_bytes=32 * 1024 * 1024),
    )(xt, xtap, coords, kp["w1t"], kp["w2t"], kp["w3t"], kp["w4t"], kp["pvec"])

    # (4C, N*Hout*Wout) -> NCHW
    return zt.reshape(4 * C, N, Hout, Wout).transpose(1, 0, 2, 3)


# ------------------------- Parameter construction -------------------------- #

def make_params(key, num_in, num_out):
    ks = jax.random.split(key, 8)
    C = num_out
    return {
        "w1": 0.3 * jax.random.normal(ks[0], (num_in, C), jnp.float32),
        "b1": 0.1 * jax.random.normal(ks[1], (1, C), jnp.float32),
        "g1": jnp.ones((1, C), jnp.float32),
        "be1": jnp.zeros((1, C), jnp.float32),
        "w2": 0.2 * jax.random.normal(ks[2], (3, 3, C, C), jnp.float32),  # HWIO
        "b2": 0.1 * jax.random.normal(ks[3], (1, C), jnp.float32),
        "g2": jnp.ones((1, C), jnp.float32),
        "be2": jnp.zeros((1, C), jnp.float32),
        "w3": 0.2 * jax.random.normal(ks[4], (C, 4 * C), jnp.float32),
        "b3": 0.1 * jax.random.normal(ks[5], (1, 4 * C), jnp.float32),
        "w4": 0.3 * jax.random.normal(ks[6], (num_in, 4 * C), jnp.float32),
        "b4": 0.1 * jax.random.normal(ks[7], (1, 4 * C), jnp.float32),
        "g3": jnp.ones((1, 4 * C), jnp.float32),
        "be3": jnp.zeros((1, 4 * C), jnp.float32),
    }


def pack_params(p, num_out):
    """Kernel-friendly packings, done once outside the hot path."""
    C = num_out
    bf16 = jnp.bfloat16
    kp = {
        "w1t": p["w1"].T.astype(bf16),                                  # (C, Cin)
        # (3,3,Cin,Cout) -> (9, Cout, Cin): tap-major transposed weights.
        "w2t": jnp.transpose(p["w2"].reshape(9, C, C), (0, 2, 1)).astype(bf16),
        "w3t": p["w3"].T.astype(bf16),                                  # (4C, C)
        "w4t": p["w4"].T.astype(bf16),                                  # (4C, Cin)
    }

    def pad_col(v):
        v = v.reshape(-1).astype(jnp.float32)
        return jnp.zeros((4 * C,), jnp.float32).at[:v.shape[0]].set(v)

    kp["pvec"] = jnp.stack(
        [pad_col(p["b1"]), pad_col(p["g1"]), pad_col(p["be1"]),
         pad_col(p["b2"]), pad_col(p["g2"]), pad_col(p["be2"]),
         pad_col(p["b3"] + p["b4"]), pad_col(p["g3"]), pad_col(p["be3"])],
        axis=1)                                                         # (4C, 9)
    return kp


# ------------------------------ Reference ---------------------------------- #

def reference(x_nchw, params, stride):
    x = jnp.transpose(x_nchw, (0, 2, 3, 1)).astype(jnp.float32)

    def bn_elu(t):
        ax = (0, 1, 2)
        m = jnp.mean(t, axis=ax, keepdims=True)
        v = jnp.mean((t - m) ** 2, axis=ax, keepdims=True)
        y = (t - m) / jnp.sqrt(v + EPS)
        return jnp.where(y > 0, y, jnp.exp(y) - 1.0)

    y1 = bn_elu(jnp.einsum("nhwc,cd->nhwd", x, params["w1"]) + params["b1"][0])
    y2c = jax.lax.conv_general_dilated(
        y1, params["w2"], window_strides=(stride, stride),
        padding=((1, 1), (1, 1)),
        dimension_numbers=("NHWC", "HWIO", "NHWC"))
    y2 = bn_elu(y2c + params["b2"][0])
    y3 = jnp.einsum("nhwc,cd->nhwd", y2, params["w3"]) + params["b3"][0]
    xs = x[:, ::stride, ::stride, :]
    sc = jnp.einsum("nhwc,cd->nhwd", xs, params["w4"]) + params["b4"][0]
    z = bn_elu(y3 + sc)
    return jnp.transpose(z, (0, 3, 1, 2))


# --------------------------------- Main ------------------------------------ #

if __name__ == "__main__":
    # ResConv(num_in_layers=4, num_out_layers=8, stride=2) on x of (2,4,16,16)
    num_in, num_out, stride = 4, 8, 2
    key = jax.random.PRNGKey(0)
    kx, kparam = jax.random.split(key)
    x = jax.random.normal(kx, (2, num_in, 16, 16), jnp.float32)   # NCHW
    params = make_params(kparam, num_in, num_out)
    kparams = pack_params(params, num_out)

    # NOTE: BatchNorm is evaluated in training mode (batch statistics), as a
    # freshly constructed PyTorch module does in forward().  The running
    # mean/var buffer *update* is a training side-effect that does not affect
    # the forward output and is not modeled.
    fwd = jax.jit(functools.partial(resconv_forward, stride=stride,
                                    num_out=num_out))
    out = jax.block_until_ready(fwd(x, kparams))
    assert out.shape == (2, 4 * num_out, 8, 8), out.shape

    ref = jax.block_until_ready(reference(x, params, stride))
    np.testing.assert_allclose(np.asarray(out), np.asarray(ref),
                               rtol=5e-2, atol=5e-2)

    print("KERNEL_OK")
</pallas_src>

<mosaic_0001>
module attributes {stable_mosaic.version = 11 : i64} {
  func.func @fused_resconv_kernel(%arg0: memref<4x512xbf16, #tpu.memory_space<vmem>>, %arg1: memref<9x4x128xbf16, #tpu.memory_space<vmem>>, %arg2: memref<2x128xi32, #tpu.memory_space<vmem>>, %arg3: memref<8x4xbf16, #tpu.memory_space<vmem>>, %arg4: memref<9x8x8xbf16, #tpu.memory_space<vmem>>, %arg5: memref<32x8xbf16, #tpu.memory_space<vmem>>, %arg6: memref<32x4xbf16, #tpu.memory_space<vmem>>, %arg7: memref<32x9xf32, #tpu.memory_space<vmem>>, %arg8: memref<32x128xf32, #tpu.memory_space<vmem>>) attributes {dimension_semantics = [], scalar_prefetch = 0 : i64, scratch_operands = 0 : i64, tpu.core_type = #tpu.core_type<tc>} {
    %c0 = arith.constant 0 : index
    %c0_0 = arith.constant 0 : index
    %0 = vector.load %arg7[%c0, %c0_0] : memref<32x9xf32, #tpu.memory_space<vmem>>, vector<32x9xf32>
    %1 = vector.extract_strided_slice %0 {offsets = [0, 0], sizes = [8, 1], strides = [1, 1]} : vector<32x9xf32> to vector<8x1xf32>
    %2 = vector.extract_strided_slice %0 {offsets = [0, 1], sizes = [8, 1], strides = [1, 1]} : vector<32x9xf32> to vector<8x1xf32>
    %3 = vector.extract_strided_slice %0 {offsets = [0, 2], sizes = [8, 1], strides = [1, 1]} : vector<32x9xf32> to vector<8x1xf32>
    %4 = vector.extract_strided_slice %0 {offsets = [0, 3], sizes = [8, 1], strides = [1, 1]} : vector<32x9xf32> to vector<8x1xf32>
    %5 = vector.extract_strided_slice %0 {offsets = [0, 4], sizes = [8, 1], strides = [1, 1]} : vector<32x9xf32> to vector<8x1xf32>
    %6 = vector.extract_strided_slice %0 {offsets = [0, 5], sizes = [8, 1], strides = [1, 1]} : vector<32x9xf32> to vector<8x1xf32>
    %7 = vector.extract_strided_slice %0 {offsets = [0, 6], sizes = [32, 1], strides = [1, 1]} : vector<32x9xf32> to vector<32x1xf32>
    %8 = vector.extract_strided_slice %0 {offsets = [0, 7], sizes = [32, 1], strides = [1, 1]} : vector<32x9xf32> to vector<32x1xf32>
    %9 = vector.extract_strided_slice %0 {offsets = [0, 8], sizes = [32, 1], strides = [1, 1]} : vector<32x9xf32> to vector<32x1xf32>
    %c0_1 = arith.constant 0 : index
    %c0_2 = arith.constant 0 : index
    %10 = vector.load %arg3[%c0_1, %c0_2] : memref<8x4xbf16, #tpu.memory_space<vmem>>, vector<8x4xbf16>
    %c0_3 = arith.constant 0 : index
    %c0_4 = arith.constant 0 : index
    %11 = vector.load %arg0[%c0_3, %c0_4] : memref<4x512xbf16, #tpu.memory_space<vmem>>, vector<4x512xbf16>
    %cst = arith.constant dense<0.000000e+00> : vector<8x512xf32>
    %12 = tpu.matmul %10, %11, %cst {dimension_numbers = #tpu.dot_dimension_numbers<[1], [0], [0], [1], [0, 0, 1, 1], [], []>} : vector<8x4xbf16>, vector<4x512xbf16>, vector<8x512xf32> -> vector<8x512xf32>
    %13 = vector.broadcast %1 : vector<8x1xf32> to vector<8x512xf32>
    %14 = arith.addf %12, %13 : vector<8x512xf32>
    %cst_5 = arith.constant dense<0.000000e+00> : vector<8xf32>
    %15 = vector.multi_reduction <add>, %14, %cst_5 [1] : vector<8x512xf32> to vector<8xf32>
    %16 = vector.shape_cast %15 : vector<8xf32> to vector<8x1xf32>
    %cst_6 = arith.constant 0.001953125 : f32
    %17 = vector.broadcast %cst_6 : f32 to vector<8x1xf32>
    %18 = arith.mulf %16, %17 : vector<8x1xf32>
    %19 = vector.broadcast %18 : vector<8x1xf32> to vector<8x512xf32>
    %20 = arith.subf %14, %19 : vector<8x512xf32>
    %21 = arith.mulf %20, %20 : vector<8x512xf32>
    %cst_7 = arith.constant dense<0.000000e+00> : vector<8xf32>
    %22 = vector.multi_reduction <add>, %21, %cst_7 [1] : vector<8x512xf32> to vector<8xf32>
    %23 = vector.shape_cast %22 : vector<8xf32> to vector<8x1xf32>
    %cst_8 = arith.constant 0.001953125 : f32
    %24 = vector.broadcast %cst_8 : f32 to vector<8x1xf32>
    %25 = arith.mulf %23, %24 : vector<8x1xf32>
    %cst_9 = arith.constant 9.99999974E-6 : f32
    %26 = vector.broadcast %cst_9 : f32 to vector<8x1xf32>
    %27 = arith.addf %25, %26 : vector<8x1xf32>
    %28 = math.rsqrt %27 : vector<8x1xf32>
    %c0_10 = arith.constant 0 : index
    %c0_11 = arith.constant 0 : index
    %29 = vector.load %arg2[%c0_10, %c0_11] : memref<2x128xi32, #tpu.memory_space<vmem>>, vector<1x128xi32>
    %c1 = arith.constant 1 : index
    %c0_12 = arith.constant 0 : index
    %30 = vector.load %arg2[%c1, %c0_12] : memref<2x128xi32, #tpu.memory_space<vmem>>, vector<1x128xi32>
    %cst_13 = arith.constant 0.000000e+00 : f32
    %31 = vector.broadcast %cst_13 : f32 to vector<8x128xf32>
    %c0_14 = arith.constant 0 : index
    %c0_15 = arith.constant 0 : index
    %c0_16 = arith.constant 0 : index
    %32 = vector.load %arg1[%c0_14, %c0_15, %c0_16] : memref<9x4x128xbf16, #tpu.memory_space<vmem>>, vector<1x4x128xbf16>
    %33 = vector.shape_cast %32 : vector<1x4x128xbf16> to vector<4x128xbf16>
    %cst_17 = arith.constant dense<0.000000e+00> : vector<8x128xf32>
    %34 = tpu.matmul %10, %33, %cst_17 {dimension_numbers = #tpu.dot_dimension_numbers<[1], [0], [0], [1], [0, 0, 1, 1], [], []>} : vector<8x4xbf16>, vector<4x128xbf16>, vector<8x128xf32> -> vector<8x128xf32>
    %35 = vector.broadcast %1 : vector<8x1xf32> to vector<8x128xf32>
    %36 = arith.addf %34, %35 : vector<8x128xf32>
    %37 = vector.broadcast %18 : vector<8x1xf32> to vector<8x128xf32>
    %38 = arith.subf %36, %37 : vector<8x128xf32>
    %39 = vector.broadcast %28 : vector<8x1xf32> to vector<8x128xf32>
    %40 = arith.mulf %38, %39 : vector<8x128xf32>
    %41 = vector.broadcast %2 : vector<8x1xf32> to vector<8x128xf32>
    %42 = arith.mulf %40, %41 : vector<8x128xf32>
    %43 = vector.broadcast %3 : vector<8x1xf32> to vector<8x128xf32>
    %44 = arith.addf %42, %43 : vector<8x128xf32>
    %cst_18 = arith.constant 0.000000e+00 : f32
    %45 = vector.broadcast %cst_18 : f32 to vector<8x128xf32>
    %46 = arith.cmpf ogt, %44, %45 : vector<8x128xf32>
    %cst_19 = arith.constant 0.000000e+00 : f32
    %47 = vector.broadcast %cst_19 : f32 to vector<8x128xf32>
    %48 = arith.minimumf %44, %47 : vector<8x128xf32>
    %49 = math.exp %48 : vector<8x128xf32>
    %cst_20 = arith.constant 1.000000e+00 : f32
    %50 = vector.broadcast %cst_20 : f32 to vector<8x128xf32>
    %51 = arith.subf %49, %50 : vector<8x128xf32>
    %52 = arith.select %46, %44, %51 : vector<8x128xi1>, vector<8x128xf32>
    %c-1_i32 = arith.constant -1 : i32
    %53 = vector.broadcast %c-1_i32 : i32 to vector<1x128xi32>
    %54 = arith.addi %29, %53 : vector<1x128xi32>
    %c-1_i32_21 = arith.constant -1 : i32
    %55 = vector.broadcast %c-1_i32_21 : i32 to vector<1x128xi32>
    %56 = arith.addi %30, %55 : vector<1x128xi32>
    %c0_i32 = arith.constant 0 : i32
    %57 = vector.broadcast %c0_i32 : i32 to vector<1x128xi32>
    %58 = arith.cmpi sge, %54, %57 : vector<1x128xi32>
    %c16_i32 = arith.constant 16 : i32
    %59 = vector.broadcast %c16_i32 : i32 to vector<1x128xi32>
    %60 = arith.cmpi slt, %54, %59 : vector<1x128xi32>
    %61 = arith.andi %58, %60 : vector<1x128xi1>
    %c0_i32_22 = arith.constant 0 : i32
    %62 = vector.broadcast %c0_i32_22 : i32 to vector<1x128xi32>
    %63 = arith.cmpi sge, %56, %62 : vector<1x128xi32>
    %64 = arith.andi %61, %63 : vector<1x128xi1>
    %c16_i32_23 = arith.constant 16 : i32
    %65 = vector.broadcast %c16_i32_23 : i32 to vector<1x128xi32>
    %66 = arith.cmpi slt, %56, %65 : vector<1x128xi32>
    %67 = arith.andi %64, %66 : vector<1x128xi1>
    %cst_24 = arith.constant 0.000000e+00 : f32
    %68 = vector.shape_cast %67 : vector<1x128xi1> to vector<1x128xi1>
    %69 = vector.broadcast %68 : vector<1x128xi1> to vector<8x128xi1>
    %70 = vector.broadcast %cst_24 : f32 to vector<8x128xf32>
    %71 = arith.select %69, %52, %70 : vector<8x128xi1>, vector<8x128xf32>
    %c0_25 = arith.constant 0 : index
    %c0_26 = arith.constant 0 : index
    %c0_27 = arith.constant 0 : index
    %72 = vector.load %arg4[%c0_25, %c0_26, %c0_27] : memref<9x8x8xbf16, #tpu.memory_space<vmem>>, vector<1x8x8xbf16>
    %73 = vector.shape_cast %72 : vector<1x8x8xbf16> to vector<8x8xbf16>
    %74 = arith.truncf %71 : vector<8x128xf32> to vector<8x128xbf16>
    %cst_28 = arith.constant dense<0.000000e+00> : vector<8x128xf32>
    %75 = tpu.matmul %73, %74, %cst_28 {dimension_numbers = #tpu.dot_dimension_numbers<[1], [0], [0], [1], [0, 0, 1, 1], [], []>} : vector<8x8xbf16>, vector<8x128xbf16>, vector<8x128xf32> -> vector<8x128xf32>
    %76 = arith.addf %31, %75 : vector<8x128xf32>
    %c1_29 = arith.constant 1 : index
    %c0_30 = arith.constant 0 : index
    %c0_31 = arith.constant 0 : index
    %77 = vector.load %arg1[%c1_29, %c0_30, %c0_31] : memref<9x4x128xbf16, #tpu.memory_space<vmem>>, vector<1x4x128xbf16>
    %78 = vector.shape_cast %77 : vector<1x4x128xbf16> to vector<4x128xbf16>
    %cst_32 = arith.constant dense<0.000000e+00> : vector<8x128xf32>
    %79 = tpu.matmul %10, %78, %cst_32 {dimension_numbers = #tpu.dot_dimension_numbers<[1], [0], [0], [1], [0, 0, 1, 1], [], []>} : vector<8x4xbf16>, vector<4x128xbf16>, vector<8x128xf32> -> vector<8x128xf32>
    %80 = vector.broadcast %1 : vector<8x1xf32> to vector<8x128xf32>
    %81 = arith.addf %79, %80 : vector<8x128xf32>
    %82 = vector.broadcast %18 : vector<8x1xf32> to vector<8x128xf32>
    %83 = arith.subf %81, %82 : vector<8x128xf32>
    %84 = vector.broadcast %28 : vector<8x1xf32> to vector<8x128xf32>
    %85 = arith.mulf %83, %84 : vector<8x128xf32>
    %86 = vector.broadcast %2 : vector<8x1xf32> to vector<8x128xf32>
    %87 = arith.mulf %85, %86 : vector<8x128xf32>
    %88 = vector.broadcast %3 : vector<8x1xf32> to vector<8x128xf32>
    %89 = arith.addf %87, %88 : vector<8x128xf32>
    %cst_33 = arith.constant 0.000000e+00 : f32
    %90 = vector.broadcast %cst_33 : f32 to vector<8x128xf32>
    %91 = arith.cmpf ogt, %89, %90 : vector<8x128xf32>
    %cst_34 = arith.constant 0.000000e+00 : f32
    %92 = vector.broadcast %cst_34 : f32 to vector<8x128xf32>
    %93 = arith.minimumf %89, %92 : vector<8x128xf32>
    %94 = math.exp %93 : vector<8x128xf32>
    %cst_35 = arith.constant 1.000000e+00 : f32
    %95 = vector.broadcast %cst_35 : f32 to vector<8x128xf32>
    %96 = arith.subf %94, %95 : vector<8x128xf32>
    %97 = arith.select %91, %89, %96 : vector<8x128xi1>, vector<8x128xf32>
    %c-1_i32_36 = arith.constant -1 : i32
    %98 = vector.broadcast %c-1_i32_36 : i32 to vector<1x128xi32>
    %99 = arith.addi %29, %98 : vector<1x128xi32>
    %c0_i32_37 = arith.constant 0 : i32
    %100 = vector.broadcast %c0_i32_37 : i32 to vector<1x128xi32>
    %101 = arith.addi %30, %100 : vector<1x128xi32>
    %c0_i32_38 = arith.constant 0 : i32
    %102 = vector.broadcast %c0_i32_38 : i32 to vector<1x128xi32>
    %103 = arith.cmpi sge, %99, %102 : vector<1x128xi32>
    %c16_i32_39 = arith.constant 16 : i32
    %104 = vector.broadcast %c16_i32_39 : i32 to vector<1x128xi32>
    %105 = arith.cmpi slt, %99, %104 : vector<1x128xi32>
    %106 = arith.andi %103, %105 : vector<1x128xi1>
    %c0_i32_40 = arith.constant 0 : i32
    %107 = vector.broadcast %c0_i32_40 : i32 to vector<1x128xi32>
    %108 = arith.cmpi sge, %101, %107 : vector<1x128xi32>
    %109 = arith.andi %106, %108 : vector<1x128xi1>
    %c16_i32_41 = arith.constant 16 : i32
    %110 = vector.broadcast %c16_i32_41 : i32 to vector<1x128xi32>
    %111 = arith.cmpi slt, %101, %110 : vector<1x128xi32>
    %112 = arith.andi %109, %111 : vector<1x128xi1>
    %cst_42 = arith.constant 0.000000e+00 : f32
    %113 = vector.shape_cast %112 : vector<1x128xi1> to vector<1x128xi1>
    %114 = vector.broadcast %113 : vector<1x128xi1> to vector<8x128xi1>
    %115 = vector.broadcast %cst_42 : f32 to vector<8x128xf32>
    %116 = arith.select %114, %97, %115 : vector<8x128xi1>, vector<8x128xf32>
    %c1_43 = arith.constant 1 : index
    %c0_44 = arith.constant 0 : index
    %c0_45 = arith.constant 0 : index
    %117 = vector.load %arg4[%c1_43, %c0_44, %c0_45] : memref<9x8x8xbf16, #tpu.memory_space<vmem>>, vector<1x8x8xbf16>
    %118 = vector.shape_cast %117 : vector<1x8x8xbf16> to vector<8x8xbf16>
    %119 = arith.truncf %116 : vector<8x128xf32> to vector<8x128xbf16>
    %cst_46 = arith.constant dense<0.000000e+00> : vector<8x128xf32>
    %120 = tpu.matmul %118, %119, %cst_46 {dimension_numbers = #tpu.dot_dimension_numbers<[1], [0], [0], [1], [0, 0, 1, 1], [], []>} : vector<8x8xbf16>, vector<8x128xbf16>, vector<8x128xf32> -> vector<8x128xf32>
    %121 = arith.addf %76, %120 : vector<8x128xf32>
    %c2 = arith.constant 2 : index
    %c0_47 = arith.constant 0 : index
    %c0_48 = arith.constant 0 : index
    %122 = vector.load %arg1[%c2, %c0_47, %c0_48] : memref<9x4x128xbf16, #tpu.memory_space<vmem>>, vector<1x4x128xbf16>
    %123 = vector.shape_cast %122 : vector<1x4x128xbf16> to vector<4x128xbf16>
    %cst_49 = arith.constant dense<0.000000e+00> : vector<8x128xf32>
    %124 = tpu.matmul %10, %123, %cst_49 {dimension_numbers = #tpu.dot_dimension_numbers<[1], [0], [0], [1], [0, 0, 1, 1], [], []>} : vector<8x4xbf16>, vector<4x128xbf16>, vector<8x128xf32> -> vector<8x128xf32>
    %125 = vector.broadcast %1 : vector<8x1xf32> to vector<8x128xf32>
    %126 = arith.addf %124, %125 : vector<8x128xf32>
    %127 = vector.broadcast %18 : vector<8x1xf32> to vector<8x128xf32>
    %128 = arith.subf %126, %127 : vector<8x128xf32>
    %129 = vector.broadcast %28 : vector<8x1xf32> to vector<8x128xf32>
    %130 = arith.mulf %128, %129 : vector<8x128xf32>
    %131 = vector.broadcast %2 : vector<8x1xf32> to vector<8x128xf32>
    %132 = arith.mulf %130, %131 : vector<8x128xf32>
    %133 = vector.broadcast %3 : vector<8x1xf32> to vector<8x128xf32>
    %134 = arith.addf %132, %133 : vector<8x128xf32>
    %cst_50 = arith.constant 0.000000e+00 : f32
    %135 = vector.broadcast %cst_50 : f32 to vector<8x128xf32>
    %136 = arith.cmpf ogt, %134, %135 : vector<8x128xf32>
    %cst_51 = arith.constant 0.000000e+00 : f32
    %137 = vector.broadcast %cst_51 : f32 to vector<8x128xf32>
    %138 = arith.minimumf %134, %137 : vector<8x128xf32>
    %139 = math.exp %138 : vector<8x128xf32>
    %cst_52 = arith.constant 1.000000e+00 : f32
    %140 = vector.broadcast %cst_52 : f32 to vector<8x128xf32>
    %141 = arith.subf %139, %140 : vector<8x128xf32>
    %142 = arith.select %136, %134, %141 : vector<8x128xi1>, vector<8x128xf32>
    %c-1_i32_53 = arith.constant -1 : i32
    %143 = vector.broadcast %c-1_i32_53 : i32 to vector<1x128xi32>
    %144 = arith.addi %29, %143 : vector<1x128xi32>
    %c1_i32 = arith.constant 1 : i32
    %145 = vector.broadcast %c1_i32 : i32 to vector<1x128xi32>
    %146 = arith.addi %30, %145 : vector<1x128xi32>
    %c0_i32_54 = arith.constant 0 : i32
    %147 = vector.broadcast %c0_i32_54 : i32 to vector<1x128xi32>
    %148 = arith.cmpi sge, %144, %147 : vector<1x128xi32>
    %c16_i32_55 = arith.constant 16 : i32
    %149 = vector.broadcast %c16_i32_55 : i32 to vector<1x128xi32>
    %150 = arith.cmpi slt, %144, %149 : vector<1x128xi32>
    %151 = arith.andi %148, %150 : vector<1x128xi1>
    %c0_i32_56 = arith.constant 0 : i32
    %152 = vector.broadcast %c0_i32_56 : i32 to vector<1x128xi32>
    %153 = arith.cmpi sge, %146, %152 : vector<1x128xi32>
    %154 = arith.andi %151, %153 : vector<1x128xi1>
    %c16_i32_57 = arith.constant 16 : i32
    %155 = vector.broadcast %c16_i32_57 : i32 to vector<1x128xi32>
    %156 = arith.cmpi slt, %146, %155 : vector<1x128xi32>
    %157 = arith.andi %154, %156 : vector<1x128xi1>
    %cst_58 = arith.constant 0.000000e+00 : f32
    %158 = vector.shape_cast %157 : vector<1x128xi1> to vector<1x128xi1>
    %159 = vector.broadcast %158 : vector<1x128xi1> to vector<8x128xi1>
    %160 = vector.broadcast %cst_58 : f32 to vector<8x128xf32>
    %161 = arith.select %159, %142, %160 : vector<8x128xi1>, vector<8x128xf32>
    %c2_59 = arith.constant 2 : index
    %c0_60 = arith.constant 0 : index
    %c0_61 = arith.constant 0 : index
    %162 = vector.load %arg4[%c2_59, %c0_60, %c0_61] : memref<9x8x8xbf16, #tpu.memory_space<vmem>>, vector<1x8x8xbf16>
    %163 = vector.shape_cast %162 : vector<1x8x8xbf16> to vector<8x8xbf16>
    %164 = arith.truncf %161 : vector<8x128xf32> to vector<8x128xbf16>
    %cst_62 = arith.constant dense<0.000000e+00> : vector<8x128xf32>
    %165 = tpu.matmul %163, %164, %cst_62 {dimension_numbers = #tpu.dot_dimension_numbers<[1], [0], [0], [1], [0, 0, 1, 1], [], []>} : vector<8x8xbf16>, vector<8x128xbf16>, vector<8x128xf32> -> vector<8x128xf32>
    %166 = arith.addf %121, %165 : vector<8x128xf32>
    %c3 = arith.constant 3 : index
    %c0_63 = arith.constant 0 : index
    %c0_64 = arith.constant 0 : index
    %167 = vector.load %arg1[%c3, %c0_63, %c0_64] : memref<9x4x128xbf16, #tpu.memory_space<vmem>>, vector<1x4x128xbf16>
    %168 = vector.shape_cast %167 : vector<1x4x128xbf16> to vector<4x128xbf16>
    %cst_65 = arith.constant dense<0.000000e+00> : vector<8x128xf32>
    %169 = tpu.matmul %10, %168, %cst_65 {dimension_numbers = #tpu.dot_dimension_numbers<[1], [0], [0], [1], [0, 0, 1, 1], [], []>} : vector<8x4xbf16>, vector<4x128xbf16>, vector<8x128xf32> -> vector<8x128xf32>
    %170 = vector.broadcast %1 : vector<8x1xf32> to vector<8x128xf32>
    %171 = arith.addf %169, %170 : vector<8x128xf32>
    %172 = vector.broadcast %18 : vector<8x1xf32> to vector<8x128xf32>
    %173 = arith.subf %171, %172 : vector<8x128xf32>
    %174 = vector.broadcast %28 : vector<8x1xf32> to vector<8x128xf32>
    %175 = arith.mulf %173, %174 : vector<8x128xf32>
    %176 = vector.broadcast %2 : vector<8x1xf32> to vector<8x128xf32>
    %177 = arith.mulf %175, %176 : vector<8x128xf32>
    %178 = vector.broadcast %3 : vector<8x1xf32> to vector<8x128xf32>
    %179 = arith.addf %177, %178 : vector<8x128xf32>
    %cst_66 = arith.constant 0.000000e+00 : f32
    %180 = vector.broadcast %cst_66 : f32 to vector<8x128xf32>
    %181 = arith.cmpf ogt, %179, %180 : vector<8x128xf32>
    %cst_67 = arith.constant 0.000000e+00 : f32
    %182 = vector.broadcast %cst_67 : f32 to vector<8x128xf32>
    %183 = arith.minimumf %179, %182 : vector<8x128xf32>
    %184 = math.exp %183 : vector<8x128xf32>
    %cst_68 = arith.constant 1.000000e+00 : f32
    %185 = vector.broadcast %cst_68 : f32 to vector<8x128xf32>
    %186 = arith.subf %184, %185 : vector<8x128xf32>
    %187 = arith.select %181, %179, %186 : vector<8x128xi1>, vector<8x128xf32>
    %c0_i32_69 = arith.constant 0 : i32
    %188 = vector.broadcast %c0_i32_69 : i32 to vector<1x128xi32>
    %189 = arith.addi %29, %188 : vector<1x128xi32>
    %c-1_i32_70 = arith.constant -1 : i32
    %190 = vector.broadcast %c-1_i32_70 : i32 to vector<1x128xi32>
    %191 = arith.addi %30, %190 : vector<1x128xi32>
    %c0_i32_71 = arith.constant 0 : i32
    %192 = vector.broadcast %c0_i32_71 : i32 to vector<1x128xi32>
    %193 = arith.cmpi sge, %189, %192 : vector<1x128xi32>
    %c16_i32_72 = arith.constant 16 : i32
    %194 = vector.broadcast %c16_i32_72 : i32 to vector<1x128xi32>
    %195 = arith.cmpi slt, %189, %194 : vector<1x128xi32>
    %196 = arith.andi %193, %195 : vector<1x128xi1>
    %c0_i32_73 = arith.constant 0 : i32
    %197 = vector.broadcast %c0_i32_73 : i32 to vector<1x128xi32>
    %198 = arith.cmpi sge, %191, %197 : vector<1x128xi32>
    %199 = arith.andi %196, %198 : vector<1x128xi1>
    %c16_i32_74 = arith.constant 16 : i32
    %200 = vector.broadcast %c16_i32_74 : i32 to vector<1x128xi32>
    %201 = arith.cmpi slt, %191, %200 : vector<1x128xi32>
    %202 = arith.andi %199, %201 : vector<1x128xi1>
    %cst_75 = arith.constant 0.000000e+00 : f32
    %203 = vector.shape_cast %202 : vector<1x128xi1> to vector<1x128xi1>
    %204 = vector.broadcast %203 : vector<1x128xi1> to vector<8x128xi1>
    %205 = vector.broadcast %cst_75 : f32 to vector<8x128xf32>
    %206 = arith.select %204, %187, %205 : vector<8x128xi1>, vector<8x128xf32>
    %c3_76 = arith.constant 3 : index
    %c0_77 = arith.constant 0 : index
    %c0_78 = arith.constant 0 : index
    %207 = vector.load %arg4[%c3_76, %c0_77, %c0_78] : memref<9x8x8xbf16, #tpu.memory_space<vmem>>, vector<1x8x8xbf16>
    %208 = vector.shape_cast %207 : vector<1x8x8xbf16> to vector<8x8xbf16>
    %209 = arith.truncf %206 : vector<8x128xf32> to vector<8x128xbf16>
    %cst_79 = arith.constant dense<0.000000e+00> : vector<8x128xf32>
    %210 = tpu.matmul %208, %209, %cst_79 {dimension_numbers = #tpu.dot_dimension_numbers<[1], [0], [0], [1], [0, 0, 1, 1], [], []>} : vector<8x8xbf16>, vector<8x128xbf16>, vector<8x128xf32> -> vector<8x128xf32>
    %211 = arith.addf %166, %210 : vector<8x128xf32>
    %c4 = arith.constant 4 : index
    %c0_80 = arith.constant 0 : index
    %c0_81 = arith.constant 0 : index
    %212 = vector.load %arg1[%c4, %c0_80, %c0_81] : memref<9x4x128xbf16, #tpu.memory_space<vmem>>, vector<1x4x128xbf16>
    %213 = vector.shape_cast %212 : vector<1x4x128xbf16> to vector<4x128xbf16>
    %cst_82 = arith.constant dense<0.000000e+00> : vector<8x128xf32>
    %214 = tpu.matmul %10, %213, %cst_82 {dimension_numbers = #tpu.dot_dimension_numbers<[1], [0], [0], [1], [0, 0, 1, 1], [], []>} : vector<8x4xbf16>, vector<4x128xbf16>, vector<8x128xf32> -> vector<8x128xf32>
    %215 = vector.broadcast %1 : vector<8x1xf32> to vector<8x128xf32>
    %216 = arith.addf %214, %215 : vector<8x128xf32>
    %217 = vector.broadcast %18 : vector<8x1xf32> to vector<8x128xf32>
    %218 = arith.subf %216, %217 : vector<8x128xf32>
    %219 = vector.broadcast %28 : vector<8x1xf32> to vector<8x128xf32>
    %220 = arith.mulf %218, %219 : vector<8x128xf32>
    %221 = vector.broadcast %2 : vector<8x1xf32> to vector<8x128xf32>
    %222 = arith.mulf %220, %221 : vector<8x128xf32>
    %223 = vector.broadcast %3 : vector<8x1xf32> to vector<8x128xf32>
    %224 = arith.addf %222, %223 : vector<8x128xf32>
    %cst_83 = arith.constant 0.000000e+00 : f32
    %225 = vector.broadcast %cst_83 : f32 to vector<8x128xf32>
    %226 = arith.cmpf ogt, %224, %225 : vector<8x128xf32>
    %cst_84 = arith.constant 0.000000e+00 : f32
    %227 = vector.broadcast %cst_84 : f32 to vector<8x128xf32>
    %228 = arith.minimumf %224, %227 : vector<8x128xf32>
    %229 = math.exp %228 : vector<8x128xf32>
    %cst_85 = arith.constant 1.000000e+00 : f32
    %230 = vector.broadcast %cst_85 : f32 to vector<8x128xf32>
    %231 = arith.subf %229, %230 : vector<8x128xf32>
    %232 = arith.select %226, %224, %231 : vector<8x128xi1>, vector<8x128xf32>
    %c0_i32_86 = arith.constant 0 : i32
    %233 = vector.broadcast %c0_i32_86 : i32 to vector<1x128xi32>
    %234 = arith.addi %29, %233 : vector<1x128xi32>
    %c0_i32_87 = arith.constant 0 : i32
    %235 = vector.broadcast %c0_i32_87 : i32 to vector<1x128xi32>
    %236 = arith.addi %30, %235 : vector<1x128xi32>
    %c0_i32_88 = arith.constant 0 : i32
    %237 = vector.broadcast %c0_i32_88 : i32 to vector<1x128xi32>
    %238 = arith.cmpi sge, %234, %237 : vector<1x128xi32>
    %c16_i32_89 = arith.constant 16 : i32
    %239 = vector.broadcast %c16_i32_89 : i32 to vector<1x128xi32>
    %240 = arith.cmpi slt, %234, %239 : vector<1x128xi32>
    %241 = arith.andi %238, %240 : vector<1x128xi1>
    %c0_i32_90 = arith.constant 0 : i32
    %242 = vector.broadcast %c0_i32_90 : i32 to vector<1x128xi32>
    %243 = arith.cmpi sge, %236, %242 : vector<1x128xi32>
    %244 = arith.andi %241, %243 : vector<1x128xi1>
    %c16_i32_91 = arith.constant 16 : i32
    %245 = vector.broadcast %c16_i32_91 : i32 to vector<1x128xi32>
    %246 = arith.cmpi slt, %236, %245 : vector<1x128xi32>
    %247 = arith.andi %244, %246 : vector<1x128xi1>
    %cst_92 = arith.constant 0.000000e+00 : f32
    %248 = vector.shape_cast %247 : vector<1x128xi1> to vector<1x128xi1>
    %249 = vector.broadcast %248 : vector<1x128xi1> to vector<8x128xi1>
    %250 = vector.broadcast %cst_92 : f32 to vector<8x128xf32>
    %251 = arith.select %249, %232, %250 : vector<8x128xi1>, vector<8x128xf32>
    %c4_93 = arith.constant 4 : index
    %c0_94 = arith.constant 0 : index
    %c0_95 = arith.constant 0 : index
    %252 = vector.load %arg4[%c4_93, %c0_94, %c0_95] : memref<9x8x8xbf16, #tpu.memory_space<vmem>>, vector<1x8x8xbf16>
    %253 = vector.shape_cast %252 : vector<1x8x8xbf16> to vector<8x8xbf16>
    %254 = arith.truncf %251 : vector<8x128xf32> to vector<8x128xbf16>
    %cst_96 = arith.constant dense<0.000000e+00> : vector<8x128xf32>
    %255 = tpu.matmul %253, %254, %cst_96 {dimension_numbers = #tpu.dot_dimension_numbers<[1], [0], [0], [1], [0, 0, 1, 1], [], []>} : vector<8x8xbf16>, vector<8x128xbf16>, vector<8x128xf32> -> vector<8x128xf32>
    %256 = arith.addf %211, %255 : vector<8x128xf32>
    %c5 = arith.constant 5 : index
    %c0_97 = arith.constant 0 : index
    %c0_98 = arith.constant 0 : index
    %257 = vector.load %arg1[%c5, %c0_97, %c0_98] : memref<9x4x128xbf16, #tpu.memory_space<vmem>>, vector<1x4x128xbf16>
    %258 = vector.shape_cast %257 : vector<1x4x128xbf16> to vector<4x128xbf16>
    %cst_99 = arith.constant dense<0.000000e+00> : vector<8x128xf32>
    %259 = tpu.matmul %10, %258, %cst_99 {dimension_numbers = #tpu.dot_dimension_numbers<[1], [0], [0], [1], [0, 0, 1, 1], [], []>} : vector<8x4xbf16>, vector<4x128xbf16>, vector<8x128xf32> -> vector<8x128xf32>
    %260 = vector.broadcast %1 : vector<8x1xf32> to vector<8x128xf32>
    %261 = arith.addf %259, %260 : vector<8x128xf32>
    %262 = vector.broadcast %18 : vector<8x1xf32> to vector<8x128xf32>
    %263 = arith.subf %261, %262 : vector<8x128xf32>
    %264 = vector.broadcast %28 : vector<8x1xf32> to vector<8x128xf32>
    %265 = arith.mulf %263, %264 : vector<8x128xf32>
    %266 = vector.broadcast %2 : vector<8x1xf32> to vector<8x128xf32>
    %267 = arith.mulf %265, %266 : vector<8x128xf32>
    %268 = vector.broadcast %3 : vector<8x1xf32> to vector<8x128xf32>
    %269 = arith.addf %267, %268 : vector<8x128xf32>
    %cst_100 = arith.constant 0.000000e+00 : f32
    %270 = vector.broadcast %cst_100 : f32 to vector<8x128xf32>
    %271 = arith.cmpf ogt, %269, %270 : vector<8x128xf32>
    %cst_101 = arith.constant 0.000000e+00 : f32
    %272 = vector.broadcast %cst_101 : f32 to vector<8x128xf32>
    %273 = arith.minimumf %269, %272 : vector<8x128xf32>
    %274 = math.exp %273 : vector<8x128xf32>
    %cst_102 = arith.constant 1.000000e+00 : f32
    %275 = vector.broadcast %cst_102 : f32 to vector<8x128xf32>
    %276 = arith.subf %274, %275 : vector<8x128xf32>
    %277 = arith.select %271, %269, %276 : vector<8x128xi1>, vector<8x128xf32>
    %c0_i32_103 = arith.constant 0 : i32
    %278 = vector.broadcast %c0_i32_103 : i32 to vector<1x128xi32>
    %279 = arith.addi %29, %278 : vector<1x128xi32>
    %c1_i32_104 = arith.constant 1 : i32
    %280 = vector.broadcast %c1_i32_104 : i32 to vector<1x128xi32>
    %281 = arith.addi %30, %280 : vector<1x128xi32>
    %c0_i32_105 = arith.constant 0 : i32
    %282 = vector.broadcast %c0_i32_105 : i32 to vector<1x128xi32>
    %283 = arith.cmpi sge, %279, %282 : vector<1x128xi32>
    %c16_i32_106 = arith.constant 16 : i32
    %284 = vector.broadcast %c16_i32_106 : i32 to vector<1x128xi32>
    %285 = arith.cmpi slt, %279, %284 : vector<1x128xi32>
    %286 = arith.andi %283, %285 : vector<1x128xi1>
    %c0_i32_107 = arith.constant 0 : i32
    %287 = vector.broadcast %c0_i32_107 : i32 to vector<1x128xi32>
    %288 = arith.cmpi sge, %281, %287 : vector<1x128xi32>
    %289 = arith.andi %286, %288 : vector<1x128xi1>
    %c16_i32_108 = arith.constant 16 : i32
    %290 = vector.broadcast %c16_i32_108 : i32 to vector<1x128xi32>
    %291 = arith.cmpi slt, %281, %290 : vector<1x128xi32>
    %292 = arith.andi %289, %291 : vector<1x128xi1>
    %cst_109 = arith.constant 0.000000e+00 : f32
    %293 = vector.shape_cast %292 : vector<1x128xi1> to vector<1x128xi1>
    %294 = vector.broadcast %293 : vector<1x128xi1> to vector<8x128xi1>
    %295 = vector.broadcast %cst_109 : f32 to vector<8x128xf32>
    %296 = arith.select %294, %277, %295 : vector<8x128xi1>, vector<8x128xf32>
    %c5_110 = arith.constant 5 : index
    %c0_111 = arith.constant 0 : index
    %c0_112 = arith.constant 0 : index
    %297 = vector.load %arg4[%c5_110, %c0_111, %c0_112] : memref<9x8x8xbf16, #tpu.memory_space<vmem>>, vector<1x8x8xbf16>
    %298 = vector.shape_cast %297 : vector<1x8x8xbf16> to vector<8x8xbf16>
    %299 = arith.truncf %296 : vector<8x128xf32> to vector<8x128xbf16>
    %cst_113 = arith.constant dense<0.000000e+00> : vector<8x128xf32>
    %300 = tpu.matmul %298, %299, %cst_113 {dimension_numbers = #tpu.dot_dimension_numbers<[1], [0], [0], [1], [0, 0, 1, 1], [], []>} : vector<8x8xbf16>, vector<8x128xbf16>, vector<8x128xf32> -> vector<8x128xf32>
    %301 = arith.addf %256, %300 : vector<8x128xf32>
    %c6 = arith.constant 6 : index
    %c0_114 = arith.constant 0 : index
    %c0_115 = arith.constant 0 : index
    %302 = vector.load %arg1[%c6, %c0_114, %c0_115] : memref<9x4x128xbf16, #tpu.memory_space<vmem>>, vector<1x4x128xbf16>
    %303 = vector.shape_cast %302 : vector<1x4x128xbf16> to vector<4x128xbf16>
    %cst_116 = arith.constant dense<0.000000e+00> : vector<8x128xf32>
    %304 = tpu.matmul %10, %303, %cst_116 {dimension_numbers = #tpu.dot_dimension_numbers<[1], [0], [0], [1], [0, 0, 1, 1], [], []>} : vector<8x4xbf16>, vector<4x128xbf16>, vector<8x128xf32> -> vector<8x128xf32>
    %305 = vector.broadcast %1 : vector<8x1xf32> to vector<8x128xf32>
    %306 = arith.addf %304, %305 : vector<8x128xf32>
    %307 = vector.broadcast %18 : vector<8x1xf32> to vector<8x128xf32>
    %308 = arith.subf %306, %307 : vector<8x128xf32>
    %309 = vector.broadcast %28 : vector<8x1xf32> to vector<8x128xf32>
    %310 = arith.mulf %308, %309 : vector<8x128xf32>
    %311 = vector.broadcast %2 : vector<8x1xf32> to vector<8x128xf32>
    %312 = arith.mulf %310, %311 : vector<8x128xf32>
    %313 = vector.broadcast %3 : vector<8x1xf32> to vector<8x128xf32>
    %314 = arith.addf %312, %313 : vector<8x128xf32>
    %cst_117 = arith.constant 0.000000e+00 : f32
    %315 = vector.broadcast %cst_117 : f32 to vector<8x128xf32>
    %316 = arith.cmpf ogt, %314, %315 : vector<8x128xf32>
    %cst_118 = arith.constant 0.000000e+00 : f32
    %317 = vector.broadcast %cst_118 : f32 to vector<8x128xf32>
    %318 = arith.minimumf %314, %317 : vector<8x128xf32>
    %319 = math.exp %318 : vector<8x128xf32>
    %cst_119 = arith.constant 1.000000e+00 : f32
    %320 = vector.broadcast %cst_119 : f32 to vector<8x128xf32>
    %321 = arith.subf %319, %320 : vector<8x128xf32>
    %322 = arith.select %316, %314, %321 : vector<8x128xi1>, vector<8x128xf32>
    %c1_i32_120 = arith.constant 1 : i32
    %323 = vector.broadcast %c1_i32_120 : i32 to vector<1x128xi32>
    %324 = arith.addi %29, %323 : vector<1x128xi32>
    %c-1_i32_121 = arith.constant -1 : i32
    %325 = vector.broadcast %c-1_i32_121 : i32 to vector<1x128xi32>
    %326 = arith.addi %30, %325 : vector<1x128xi32>
    %c0_i32_122 = arith.constant 0 : i32
    %327 = vector.broadcast %c0_i32_122 : i32 to vector<1x128xi32>
    %328 = arith.cmpi sge, %324, %327 : vector<1x128xi32>
    %c16_i32_123 = arith.constant 16 : i32
    %329 = vector.broadcast %c16_i32_123 : i32 to vector<1x128xi32>
    %330 = arith.cmpi slt, %324, %329 : vector<1x128xi32>
    %331 = arith.andi %328, %330 : vector<1x128xi1>
    %c0_i32_124 = arith.constant 0 : i32
    %332 = vector.broadcast %c0_i32_124 : i32 to vector<1x128xi32>
    %333 = arith.cmpi sge, %326, %332 : vector<1x128xi32>
    %334 = arith.andi %331, %333 : vector<1x128xi1>
    %c16_i32_125 = arith.constant 16 : i32
    %335 = vector.broadcast %c16_i32_125 : i32 to vector<1x128xi32>
    %336 = arith.cmpi slt, %326, %335 : vector<1x128xi32>
    %337 = arith.andi %334, %336 : vector<1x128xi1>
    %cst_126 = arith.constant 0.000000e+00 : f32
    %338 = vector.shape_cast %337 : vector<1x128xi1> to vector<1x128xi1>
    %339 = vector.broadcast %338 : vector<1x128xi1> to vector<8x128xi1>
    %340 = vector.broadcast %cst_126 : f32 to vector<8x128xf32>
    %341 = arith.select %339, %322, %340 : vector<8x128xi1>, vector<8x128xf32>
    %c6_127 = arith.constant 6 : index
    %c0_128 = arith.constant 0 : index
    %c0_129 = arith.constant 0 : index
    %342 = vector.load %arg4[%c6_127, %c0_128, %c0_129] : memref<9x8x8xbf16, #tpu.memory_space<vmem>>, vector<1x8x8xbf16>
    %343 = vector.shape_cast %342 : vector<1x8x8xbf16> to vector<8x8xbf16>
    %344 = arith.truncf %341 : vector<8x128xf32> to vector<8x128xbf16>
    %cst_130 = arith.constant dense<0.000000e+00> : vector<8x128xf32>
    %345 = tpu.matmul %343, %344, %cst_130 {dimension_numbers = #tpu.dot_dimension_numbers<[1], [0], [0], [1], [0, 0, 1, 1], [], []>} : vector<8x8xbf16>, vector<8x128xbf16>, vector<8x128xf32> -> vector<8x128xf32>
    %346 = arith.addf %301, %345 : vector<8x128xf32>
    %c7 = arith.constant 7 : index
    %c0_131 = arith.constant 0 : index
    %c0_132 = arith.constant 0 : index
    %347 = vector.load %arg1[%c7, %c0_131, %c0_132] : memref<9x4x128xbf16, #tpu.memory_space<vmem>>, vector<1x4x128xbf16>
    %348 = vector.shape_cast %347 : vector<1x4x128xbf16> to vector<4x128xbf16>
    %cst_133 = arith.constant dense<0.000000e+00> : vector<8x128xf32>
    %349 = tpu.matmul %10, %348, %cst_133 {dimension_numbers = #tpu.dot_dimension_numbers<[1], [0], [0], [1], [0, 0, 1, 1], [], []>} : vector<8x4xbf16>, vector<4x128xbf16>, vector<8x128xf32> -> vector<8x128xf32>
    %350 = vector.broadcast %1 : vector<8x1xf32> to vector<8x128xf32>
    %351 = arith.addf %349, %350 : vector<8x128xf32>
    %352 = vector.broadcast %18 : vector<8x1xf32> to vector<8x128xf32>
    %353 = arith.subf %351, %352 : vector<8x128xf32>
    %354 = vector.broadcast %28 : vector<8x1xf32> to vector<8x128xf32>
    %355 = arith.mulf %353, %354 : vector<8x128xf32>
    %356 = vector.broadcast %2 : vector<8x1xf32> to vector<8x128xf32>
    %357 = arith.mulf %355, %356 : vector<8x128xf32>
    %358 = vector.broadcast %3 : vector<8x1xf32> to vector<8x128xf32>
    %359 = arith.addf %357, %358 : vector<8x128xf32>
    %cst_134 = arith.constant 0.000000e+00 : f32
    %360 = vector.broadcast %cst_134 : f32 to vector<8x128xf32>
    %361 = arith.cmpf ogt, %359, %360 : vector<8x128xf32>
    %cst_135 = arith.constant 0.000000e+00 : f32
    %362 = vector.broadcast %cst_135 : f32 to vector<8x128xf32>
    %363 = arith.minimumf %359, %362 : vector<8x128xf32>
    %364 = math.exp %363 : vector<8x128xf32>
    %cst_136 = arith.constant 1.000000e+00 : f32
    %365 = vector.broadcast %cst_136 : f32 to vector<8x128xf32>
    %366 = arith.subf %364, %365 : vector<8x128xf32>
    %367 = arith.select %361, %359, %366 : vector<8x128xi1>, vector<8x128xf32>
    %c1_i32_137 = arith.constant 1 : i32
    %368 = vector.broadcast %c1_i32_137 : i32 to vector<1x128xi32>
    %369 = arith.addi %29, %368 : vector<1x128xi32>
    %c0_i32_138 = arith.constant 0 : i32
    %370 = vector.broadcast %c0_i32_138 : i32 to vector<1x128xi32>
    %371 = arith.addi %30, %370 : vector<1x128xi32>
    %c0_i32_139 = arith.constant 0 : i32
    %372 = vector.broadcast %c0_i32_139 : i32 to vector<1x128xi32>
    %373 = arith.cmpi sge, %369, %372 : vector<1x128xi32>
    %c16_i32_140 = arith.constant 16 : i32
    %374 = vector.broadcast %c16_i32_140 : i32 to vector<1x128xi32>
    %375 = arith.cmpi slt, %369, %374 : vector<1x128xi32>
    %376 = arith.andi %373, %375 : vector<1x128xi1>
    %c0_i32_141 = arith.constant 0 : i32
    %377 = vector.broadcast %c0_i32_141 : i32 to vector<1x128xi32>
    %378 = arith.cmpi sge, %371, %377 : vector<1x128xi32>
    %379 = arith.andi %376, %378 : vector<1x128xi1>
    %c16_i32_142 = arith.constant 16 : i32
    %380 = vector.broadcast %c16_i32_142 : i32 to vector<1x128xi32>
    %381 = arith.cmpi slt, %371, %380 : vector<1x128xi32>
    %382 = arith.andi %379, %381 : vector<1x128xi1>
    %cst_143 = arith.constant 0.000000e+00 : f32
    %383 = vector.shape_cast %382 : vector<1x128xi1> to vector<1x128xi1>
    %384 = vector.broadcast %383 : vector<1x128xi1> to vector<8x128xi1>
    %385 = vector.broadcast %cst_143 : f32 to vector<8x128xf32>
    %386 = arith.select %384, %367, %385 : vector<8x128xi1>, vector<8x128xf32>
    %c7_144 = arith.constant 7 : index
    %c0_145 = arith.constant 0 : index
    %c0_146 = arith.constant 0 : index
    %387 = vector.load %arg4[%c7_144, %c0_145, %c0_146] : memref<9x8x8xbf16, #tpu.memory_space<vmem>>, vector<1x8x8xbf16>
    %388 = vector.shape_cast %387 : vector<1x8x8xbf16> to vector<8x8xbf16>
    %389 = arith.truncf %386 : vector<8x128xf32> to vector<8x128xbf16>
    %cst_147 = arith.constant dense<0.000000e+00> : vector<8x128xf32>
    %390 = tpu.matmul %388, %389, %cst_147 {dimension_numbers = #tpu.dot_dimension_numbers<[1], [0], [0], [1], [0, 0, 1, 1], [], []>} : vector<8x8xbf16>, vector<8x128xbf16>, vector<8x128xf32> -> vector<8x128xf32>
    %391 = arith.addf %346, %390 : vector<8x128xf32>
    %c8 = arith.constant 8 : index
    %c0_148 = arith.constant 0 : index
    %c0_149 = arith.constant 0 : index
    %392 = vector.load %arg1[%c8, %c0_148, %c0_149] : memref<9x4x128xbf16, #tpu.memory_space<vmem>>, vector<1x4x128xbf16>
    %393 = vector.shape_cast %392 : vector<1x4x128xbf16> to vector<4x128xbf16>
    %cst_150 = arith.constant dense<0.000000e+00> : vector<8x128xf32>
    %394 = tpu.matmul %10, %393, %cst_150 {dimension_numbers = #tpu.dot_dimension_numbers<[1], [0], [0], [1], [0, 0, 1, 1], [], []>} : vector<8x4xbf16>, vector<4x128xbf16>, vector<8x128xf32> -> vector<8x128xf32>
    %395 = vector.broadcast %1 : vector<8x1xf32> to vector<8x128xf32>
    %396 = arith.addf %394, %395 : vector<8x128xf32>
    %397 = vector.broadcast %18 : vector<8x1xf32> to vector<8x128xf32>
    %398 = arith.subf %396, %397 : vector<8x128xf32>
    %399 = vector.broadcast %28 : vector<8x1xf32> to vector<8x128xf32>
    %400 = arith.mulf %398, %399 : vector<8x128xf32>
    %401 = vector.broadcast %2 : vector<8x1xf32> to vector<8x128xf32>
    %402 = arith.mulf %400, %401 : vector<8x128xf32>
    %403 = vector.broadcast %3 : vector<8x1xf32> to vector<8x128xf32>
    %404 = arith.addf %402, %403 : vector<8x128xf32>
    %cst_151 = arith.constant 0.000000e+00 : f32
    %405 = vector.broadcast %cst_151 : f32 to vector<8x128xf32>
    %406 = arith.cmpf ogt, %404, %405 : vector<8x128xf32>
    %cst_152 = arith.constant 0.000000e+00 : f32
    %407 = vector.broadcast %cst_152 : f32 to vector<8x128xf32>
    %408 = arith.minimumf %404, %407 : vector<8x128xf32>
    %409 = math.exp %408 : vector<8x128xf32>
    %cst_153 = arith.constant 1.000000e+00 : f32
    %410 = vector.broadcast %cst_153 : f32 to vector<8x128xf32>
    %411 = arith.subf %409, %410 : vector<8x128xf32>
    %412 = arith.select %406, %404, %411 : vector<8x128xi1>, vector<8x128xf32>
    %c1_i32_154 = arith.constant 1 : i32
    %413 = vector.broadcast %c1_i32_154 : i32 to vector<1x128xi32>
    %414 = arith.addi %29, %413 : vector<1x128xi32>
    %c1_i32_155 = arith.constant 1 : i32
    %415 = vector.broadcast %c1_i32_155 : i32 to vector<1x128xi32>
    %416 = arith.addi %30, %415 : vector<1x128xi32>
    %c0_i32_156 = arith.constant 0 : i32
    %417 = vector.broadcast %c0_i32_156 : i32 to vector<1x128xi32>
    %418 = arith.cmpi sge, %414, %417 : vector<1x128xi32>
    %c16_i32_157 = arith.constant 16 : i32
    %419 = vector.broadcast %c16_i32_157 : i32 to vector<1x128xi32>
    %420 = arith.cmpi slt, %414, %419 : vector<1x128xi32>
    %421 = arith.andi %418, %420 : vector<1x128xi1>
    %c0_i32_158 = arith.constant 0 : i32
    %422 = vector.broadcast %c0_i32_158 : i32 to vector<1x128xi32>
    %423 = arith.cmpi sge, %416, %422 : vector<1x128xi32>
    %424 = arith.andi %421, %423 : vector<1x128xi1>
    %c16_i32_159 = arith.constant 16 : i32
    %425 = vector.broadcast %c16_i32_159 : i32 to vector<1x128xi32>
    %426 = arith.cmpi slt, %416, %425 : vector<1x128xi32>
    %427 = arith.andi %424, %426 : vector<1x128xi1>
    %cst_160 = arith.constant 0.000000e+00 : f32
    %428 = vector.shape_cast %427 : vector<1x128xi1> to vector<1x128xi1>
    %429 = vector.broadcast %428 : vector<1x128xi1> to vector<8x128xi1>
    %430 = vector.broadcast %cst_160 : f32 to vector<8x128xf32>
    %431 = arith.select %429, %412, %430 : vector<8x128xi1>, vector<8x128xf32>
    %c8_161 = arith.constant 8 : index
    %c0_162 = arith.constant 0 : index
    %c0_163 = arith.constant 0 : index
    %432 = vector.load %arg4[%c8_161, %c0_162, %c0_163] : memref<9x8x8xbf16, #tpu.memory_space<vmem>>, vector<1x8x8xbf16>
    %433 = vector.shape_cast %432 : vector<1x8x8xbf16> to vector<8x8xbf16>
    %434 = arith.truncf %431 : vector<8x128xf32> to vector<8x128xbf16>
    %cst_164 = arith.constant dense<0.000000e+00> : vector<8x128xf32>
    %435 = tpu.matmul %433, %434, %cst_164 {dimension_numbers = #tpu.dot_dimension_numbers<[1], [0], [0], [1], [0, 0, 1, 1], [], []>} : vector<8x8xbf16>, vector<8x128xbf16>, vector<8x128xf32> -> vector<8x128xf32>
    %436 = arith.addf %391, %435 : vector<8x128xf32>
    %437 = vector.broadcast %4 : vector<8x1xf32> to vector<8x128xf32>
    %438 = arith.addf %436, %437 : vector<8x128xf32>
    %cst_165 = arith.constant dense<0.000000e+00> : vector<8xf32>
    %439 = vector.multi_reduction <add>, %438, %cst_165 [1] : vector<8x128xf32> to vector<8xf32>
    %440 = vector.shape_cast %439 : vector<8xf32> to vector<8x1xf32>
    %cst_166 = arith.constant 7.812500e-03 : f32
    %441 = vector.broadcast %cst_166 : f32 to vector<8x1xf32>
    %442 = arith.mulf %440, %441 : vector<8x1xf32>
    %443 = vector.broadcast %442 : vector<8x1xf32> to vector<8x128xf32>
    %444 = arith.subf %438, %443 : vector<8x128xf32>
    %445 = arith.mulf %444, %444 : vector<8x128xf32>
    %cst_167 = arith.constant dense<0.000000e+00> : vector<8xf32>
    %446 = vector.multi_reduction <add>, %445, %cst_167 [1] : vector<8x128xf32> to vector<8xf32>
    %447 = vector.shape_cast %446 : vector<8xf32> to vector<8x1xf32>
    %cst_168 = arith.constant 7.812500e-03 : f32
    %448 = vector.broadcast %cst_168 : f32 to vector<8x1xf32>
    %449 = arith.mulf %447, %448 : vector<8x1xf32>
    %450 = vector.broadcast %442 : vector<8x1xf32> to vector<8x128xf32>
    %451 = arith.subf %438, %450 : vector<8x128xf32>
    %cst_169 = arith.constant 9.99999974E-6 : f32
    %452 = vector.broadcast %cst_169 : f32 to vector<8x1xf32>
    %453 = arith.addf %449, %452 : vector<8x1xf32>
    %454 = math.rsqrt %453 : vector<8x1xf32>
    %455 = vector.broadcast %454 : vector<8x1xf32> to vector<8x128xf32>
    %456 = arith.mulf %451, %455 : vector<8x128xf32>
    %457 = vector.broadcast %5 : vector<8x1xf32> to vector<8x128xf32>
    %458 = arith.mulf %456, %457 : vector<8x128xf32>
    %459 = vector.broadcast %6 : vector<8x1xf32> to vector<8x128xf32>
    %460 = arith.addf %458, %459 : vector<8x128xf32>
    %cst_170 = arith.constant 0.000000e+00 : f32
    %461 = vector.broadcast %cst_170 : f32 to vector<8x128xf32>
    %462 = arith.cmpf ogt, %460, %461 : vector<8x128xf32>
    %cst_171 = arith.constant 0.000000e+00 : f32
    %463 = vector.broadcast %cst_171 : f32 to vector<8x128xf32>
    %464 = arith.minimumf %460, %463 : vector<8x128xf32>
    %465 = math.exp %464 : vector<8x128xf32>
    %cst_172 = arith.constant 1.000000e+00 : f32
    %466 = vector.broadcast %cst_172 : f32 to vector<8x128xf32>
    %467 = arith.subf %465, %466 : vector<8x128xf32>
    %468 = arith.select %462, %460, %467 : vector<8x128xi1>, vector<8x128xf32>
    %c0_173 = arith.constant 0 : index
    %c0_174 = arith.constant 0 : index
    %469 = vector.load %arg5[%c0_173, %c0_174] : memref<32x8xbf16, #tpu.memory_space<vmem>>, vector<32x8xbf16>
    %470 = arith.truncf %468 : vector<8x128xf32> to vector<8x128xbf16>
    %cst_175 = arith.constant dense<0.000000e+00> : vector<32x128xf32>
    %471 = tpu.matmul %469, %470, %cst_175 {dimension_numbers = #tpu.dot_dimension_numbers<[1], [0], [0], [1], [0, 0, 1, 1], [], []>} : vector<32x8xbf16>, vector<8x128xbf16>, vector<32x128xf32> -> vector<32x128xf32>
    %c0_176 = arith.constant 0 : index
    %c0_177 = arith.constant 0 : index
    %472 = vector.load %arg6[%c0_176, %c0_177] : memref<32x4xbf16, #tpu.memory_space<vmem>>, vector<32x4xbf16>
    %c4_178 = arith.constant 4 : index
    %c0_179 = arith.constant 0 : index
    %c0_180 = arith.constant 0 : index
    %473 = vector.load %arg1[%c4_178, %c0_179, %c0_180] : memref<9x4x128xbf16, #tpu.memory_space<vmem>>, vector<1x4x128xbf16>
    %474 = vector.shape_cast %473 : vector<1x4x128xbf16> to vector<4x128xbf16>
    %cst_181 = arith.constant dense<0.000000e+00> : vector<32x128xf32>
    %475 = tpu.matmul %472, %474, %cst_181 {dimension_numbers = #tpu.dot_dimension_numbers<[1], [0], [0], [1], [0, 0, 1, 1], [], []>} : vector<32x4xbf16>, vector<4x128xbf16>, vector<32x128xf32> -> vector<32x128xf32>
    %476 = arith.addf %471, %475 : vector<32x128xf32>
    %477 = vector.broadcast %7 : vector<32x1xf32> to vector<32x128xf32>
    %478 = arith.addf %476, %477 : vector<32x128xf32>
    %cst_182 = arith.constant dense<0.000000e+00> : vector<32xf32>
    %479 = vector.multi_reduction <add>, %478, %cst_182 [1] : vector<32x128xf32> to vector<32xf32>
    %480 = vector.shape_cast %479 : vector<32xf32> to vector<32x1xf32>
    %cst_183 = arith.constant 7.812500e-03 : f32
    %481 = vector.broadcast %cst_183 : f32 to vector<32x1xf32>
    %482 = arith.mulf %480, %481 : vector<32x1xf32>
    %483 = vector.broadcast %482 : vector<32x1xf32> to vector<32x128xf32>
    %484 = arith.subf %478, %483 : vector<32x128xf32>
    %485 = arith.mulf %484, %484 : vector<32x128xf32>
    %cst_184 = arith.constant dense<0.000000e+00> : vector<32xf32>
    %486 = vector.multi_reduction <add>, %485, %cst_184 [1] : vector<32x128xf32> to vector<32xf32>
    %487 = vector.shape_cast %486 : vector<32xf32> to vector<32x1xf32>
    %cst_185 = arith.constant 7.812500e-03 : f32
    %488 = vector.broadcast %cst_185 : f32 to vector<32x1xf32>
    %489 = arith.mulf %487, %488 : vector<32x1xf32>
    %490 = vector.broadcast %482 : vector<32x1xf32> to vector<32x128xf32>
    %491 = arith.subf %478, %490 : vector<32x128xf32>
    %cst_186 = arith.constant 9.99999974E-6 : f32
    %492 = vector.broadcast %cst_186 : f32 to vector<32x1xf32>
    %493 = arith.addf %489, %492 : vector<32x1xf32>
    %494 = math.rsqrt %493 : vector<32x1xf32>
    %495 = vector.broadcast %494 : vector<32x1xf32> to vector<32x128xf32>
    %496 = arith.mulf %491, %495 : vector<32x128xf32>
    %497 = vector.broadcast %8 : vector<32x1xf32> to vector<32x128xf32>
    %498 = arith.mulf %496, %497 : vector<32x128xf32>
    %499 = vector.broadcast %9 : vector<32x1xf32> to vector<32x128xf32>
    %500 = arith.addf %498, %499 : vector<32x128xf32>
    %cst_187 = arith.constant 0.000000e+00 : f32
    %501 = vector.broadcast %cst_187 : f32 to vector<32x128xf32>
    %502 = arith.cmpf ogt, %500, %501 : vector<32x128xf32>
    %cst_188 = arith.constant 0.000000e+00 : f32
    %503 = vector.broadcast %cst_188 : f32 to vector<32x128xf32>
    %504 = arith.minimumf %500, %503 : vector<32x128xf32>
    %505 = math.exp %504 : vector<32x128xf32>
    %cst_189 = arith.constant 1.000000e+00 : f32
    %506 = vector.broadcast %cst_189 : f32 to vector<32x128xf32>
    %507 = arith.subf %505, %506 : vector<32x128xf32>
    %508 = arith.select %502, %500, %507 : vector<32x128xi1>, vector<32x128xf32>
    %c0_190 = arith.constant 0 : index
    %c0_191 = arith.constant 0 : index
    %509 = vector.load %arg8[%c0_190, %c0_191] : memref<32x128xf32, #tpu.memory_space<vmem>>, vector<32x128xf32>
    tpu.vector_store %arg8[%c0_190, %c0_191], %508 {strides = array<i32>} : memref<32x128xf32, #tpu.memory_space<vmem>>, vector<32x128xf32>,
    return
  }
}

</mosaic_0001>

<llo_original>
// kernel: resconv_forward.1
$region0: #{resconv_forward.1}
  #allocation0 [shape = 'u32[]', space=smem, size = 0x4, offset = 0x4, fixed_abs, tag = 'smem constant byte address 0x4 - core index']
  #allocation1 [shape = 'u32[144,128]{1,0:T(1,128)}', space=vmem, size = 0x12000, scoped, tag = 'internal scratch']
  %s0 = inlined_call_operand.vmem [shape: bf16[4,512], index: 0, kind: input, shape index: {}]
  %s1 = inlined_call_operand.vmem [shape: bf16[9,4,128], index: 1, kind: input, shape index: {}]
  %s2 = inlined_call_operand.vmem [shape: s32[2,128], index: 2, kind: input, shape index: {}]
  %s3 = inlined_call_operand.vmem [shape: bf16[8,4], index: 3, kind: input, shape index: {}]
  %s4 = inlined_call_operand.vmem [shape: bf16[9,8,8], index: 4, kind: input, shape index: {}]
  %s5 = inlined_call_operand.vmem [shape: bf16[32,8], index: 5, kind: input, shape index: {}]
  %s6 = inlined_call_operand.vmem [shape: bf16[32,4], index: 6, kind: input, shape index: {}]
  %s7 = inlined_call_operand.vmem [shape: f32[32,9], index: 7, kind: input, shape index: {}]
  %s8 = inlined_call_operand.vmem [shape: f32[32,128], index: 8, kind: output, shape index: {}]
  %s9 = sld [smem:[#allocation0]]
  $region42: #{resconv_forward.1} parent=0
    _
  %s11 = ssub.s32 1, %s9
  %s12 = scalar_select 0, %s11, %s9
  // Predicated region
  $region2: #{resconv_forward.1} parent=0 // pred_check
    _
  $region3: #{resconv_forward.1} parent=0 // pred_check_branch
    %14 = sbr.rel (0) target = $region5
  $region4: #{resconv_forward.1} parent=0 // pred_region
    _
  $region5: #{resconv_forward.1} parent=0 // pred_fallthru
    _
  // Predicated region
  $region6: #{resconv_forward.1} parent=0 // pred_check
    _
  $region7: #{resconv_forward.1} parent=0 // pred_check_branch
    %16 = sbr.rel (0) target = $region9
  $region8: #{resconv_forward.1} parent=0 // pred_region
    _
  $region9: #{resconv_forward.1} parent=0 // pred_fallthru
    _
  // Predicated region
  $region10: #{resconv_forward.1} parent=0 // pred_check
    _
  $region11: #{resconv_forward.1} parent=0 // pred_check_branch
    %18 = sbr.rel (0) target = $region13
  $region12: #{resconv_forward.1} parent=0 // pred_region
    _
  $region13: #{resconv_forward.1} parent=0 // pred_fallthru
    _
  // Predicated region
  $region14: #{resconv_forward.1} parent=0 // pred_check
    _
  $region15: #{resconv_forward.1} parent=0 // pred_check_branch
    %20 = sbr.rel (0) target = $region17
  $region16: #{resconv_forward.1} parent=0 // pred_region
    _
  $region17: #{resconv_forward.1} parent=0 // pred_fallthru
    _
  // Predicated region
  $region18: #{resconv_forward.1} parent=0 // pred_check
    _
  $region19: #{resconv_forward.1} parent=0 // pred_check_branch
    %22 = sbr.rel (0) target = $region21
  $region20: #{resconv_forward.1} parent=0 // pred_region
    _
  $region21: #{resconv_forward.1} parent=0 // pred_fallthru
    _
  // Predicated region
  $region22: #{resconv_forward.1} parent=0 // pred_check
    _
  $region23: #{resconv_forward.1} parent=0 // pred_check_branch
    %24 = sbr.rel (0) target = $region25
  $region24: #{resconv_forward.1} parent=0 // pred_region
    _
  $region25: #{resconv_forward.1} parent=0 // pred_fallthru
    _
  // Predicated region
  $region26: #{resconv_forward.1} parent=0 // pred_check
    _
  $region27: #{resconv_forward.1} parent=0 // pred_check_branch
    %26 = sbr.rel (0) target = $region29
  $region28: #{resconv_forward.1} parent=0 // pred_region
    _
  $region29: #{resconv_forward.1} parent=0 // pred_fallthru
    _
  // Predicated region
  $region30: #{resconv_forward.1} parent=0 // pred_check
    _
  $region31: #{resconv_forward.1} parent=0 // pred_check_branch
    %28 = sbr.rel (0) target = $region33
  $region32: #{resconv_forward.1} parent=0 // pred_region
    _
  $region33: #{resconv_forward.1} parent=0 // pred_fallthru
    _
  %v30 = vld [vmem:[%s7] sm:$0xff]
  %v31 = vld [vmem:[%s7 + $0x8] sm:$0xff]
  %v32 = vld [vmem:[%s7 + $0x10] sm:$0xff]
  %v33 = vld [vmem:[%s7 + $0x18] sm:$0xff]
  %v34 = vld [vmem:[%s3] sm:$0xf]
  %v35 = vld [vmem:[%s0] sm:$0xff]
  %37 = vset.pattern.permute.xlu0 0
  %38 = vperm.xlu0 %37, %v30
  %v39 = vpop.permute.xlu0 %38
  %v42 = vcombine.high %v35, %v35
  %v44 = vunpack.c.l.s4 1983009808
  %v45 = vunpack.c.0.s8 %v44
  %v46 = vlaneseq
  %v47 = vshrl.u32 %v46, 7
  %v48 = vsub.s32 %v45, %v47
  %v49 = vrot.slane %v35, %v48
  %v51 = vunpack.c.l.s4 1983009808
  %v52 = vunpack.c.0.s8 %v51
  %v53 = vlaneseq
  %v54 = vshrl.u32 %v53, 7
  %v55 = vsub.s32 %v52, %v54
  %v56 = vrot.slane %v42, %v55
  %v57 = vcombine.high %v49, %v49
  %v58 = vcombine.high %v56, %v56
  %vm59 = vcmask 31744
  %v61 = vsel %vm59, %v34, 0
  %vm63 = vcmask 1041408
  %v65 = vsel %vm63, %v49, 0
  %v68 = vsel %vm63, %v57, 0
  %v71 = vsel %vm63, %v56, 0
  %v74 = vsel %vm63, %v58, 0
  %76 = vmatprep.subr.bf16.mxu0 0
  %77 = vmatpush1.bf16.msra.mxu0 0
  %78 = vmatprep.subr.bf16.mxu0 0
  %79 = vmatpush1.bf16.msra.mxu0 0
  %80 = vmatprep.subr.bf16.mxu0 0
  %81 = vmatpush1.bf16.msra.mxu0 0
  %82 = vmatprep.subr.bf16.mxu0 0
  %83 = vmatpush1.bf16.msra.mxu0 0
  %84 = vmatprep.subr.bf16.mxu0 0
  %85 = vmatpush1.bf16.msra.mxu0 0
  %86 = vmatprep.subr.bf16.mxu0 0
  %87 = vmatpush1.bf16.msra.mxu0 0
  %88 = vmatprep.subr.bf16.mxu0 0
  %89 = vmatpush1.bf16.msra.mxu0 0
  %90 = vmatprep.subr.bf16.mxu0 %v68
  %91 = vmatpush1.bf16.msra.mxu0 %v65
  %92 = vmatprep.subr.bf16.mxu0 0
  %93 = vmatpush2.bf16.msra.mxu0 0
  %94 = vmatprep.subr.bf16.mxu0 0
  %95 = vmatpush2.bf16.msra.mxu0 0
  %96 = vmatprep.subr.bf16.mxu0 0
  %97 = vmatpush2.bf16.msra.mxu0 0
  %98 = vmatprep.subr.bf16.mxu0 0
  %99 = vmatpush2.bf16.msra.mxu0 0
  %100 = vmatprep.subr.bf16.mxu0 0
  %101 = vmatpush2.bf16.msra.mxu0 0
  %102 = vmatprep.subr.bf16.mxu0 0
  %103 = vmatpush2.bf16.msra.mxu0 0
  %104 = vmatprep.subr.bf16.mxu0 0
  %105 = vmatpush2.bf16.msra.mxu0 0
  %106 = vmatprep.subr.bf16.mxu0 0
  %107 = vmatpush2.bf16.msra.mxu0 0
  %108 = vmatprep.mubr.bf16.mxu0 0
  %109 = vmatmul.mubr.bf16.gmra.mxu0 %v61
  %v110 = vpop.f32.mrf.mxu0
  %v111 = vadd.f32 %v39, %v110
  %v112 = vpop.f32.mrf.mxu0
  %v113 = vadd.f32 %v39, %v112
  %v114 = vpop.f32.mrf.mxu0
  %v115 = vpop.f32.mrf.mxu0
  %116 = vdwg.mxu0
  %117 = vmatprep.subr.bf16.mxu0 0
  %118 = vmatpush1.bf16.msra.mxu0 0
  %119 = vmatprep.subr.bf16.mxu0 0
  %120 = vmatpush1.bf16.msra.mxu0 0
  %121 = vmatprep.subr.bf16.mxu0 0
  %122 = vmatpush1.bf16.msra.mxu0 0
  %123 = vmatprep.subr.bf16.mxu0 0
  %124 = vmatpush1.bf16.msra.mxu0 0
  %125 = vmatprep.subr.bf16.mxu0 0
  %126 = vmatpush1.bf16.msra.mxu0 0
  %127 = vmatprep.subr.bf16.mxu0 0
  %128 = vmatpush1.bf16.msra.mxu0 0
  %129 = vmatprep.subr.bf16.mxu0 0
  %130 = vmatpush1.bf16.msra.mxu0 0
  %131 = vmatprep.subr.bf16.mxu0 %v74
  %132 = vmatpush1.bf16.msra.mxu0 %v71
  %133 = vmatprep.subr.bf16.mxu0 0
  %134 = vmatpush2.bf16.msra.mxu0 0
  %135 = vmatprep.subr.bf16.mxu0 0
  %136 = vmatpush2.bf16.msra.mxu0 0
  %137 = vmatprep.subr.bf16.mxu0 0
  %138 = vmatpush2.bf16.msra.mxu0 0
  %139 = vmatprep.subr.bf16.mxu0 0
  %140 = vmatpush2.bf16.msra.mxu0 0
  %141 = vmatprep.subr.bf16.mxu0 0
  %142 = vmatpush2.bf16.msra.mxu0 0
  %143 = vmatprep.subr.bf16.mxu0 0
  %144 = vmatpush2.bf16.msra.mxu0 0
  %145 = vmatprep.subr.bf16.mxu0 0
  %146 = vmatpush2.bf16.msra.mxu0 0
  %147 = vmatprep.subr.bf16.mxu0 0
  %148 = vmatpush2.bf16.msra.mxu0 0
  %149 = vmatprep.mubr.bf16.mxu0 0
  %150 = vmatmul.mubr.bf16.gmra.mxu0 %v61
  %v151 = vpop.f32.mrf.mxu0
  %v152 = vadd.f32 %v39, %v151
  %v153 = vpop.f32.mrf.mxu0
  %v154 = vadd.f32 %v39, %v153
  %v155 = vpop.f32.mrf.mxu0
  %v156 = vpop.f32.mrf.mxu0
  %157 = vdwg.mxu0
  %v158 = vadd.f32 %v111, %v113
  %v159 = vadd.f32 %v158, %v152
  %v160 = vadd.f32 %v159, %v154
  %161 = vadd.xlane.f32.xlu0 %v160
  %v162 = vpop.xlane.xlu0 %161
  %v163 = vmul.f32 %v162, 0.001953125
  %v164 = vsub.f32 %v111, %v163
  %v165 = vsub.f32 %v113, %v163
  %v166 = vsub.f32 %v152, %v163
  %v167 = vsub.f32 %v154, %v163
  %v168 = vmul.f32 %v164, %v164
  %v169 = vmul.f32 %v165, %v165
  %v170 = vmul.f32 %v166, %v166
  %v171 = vmul.f32 %v167, %v167
  %v172 = vadd.f32 %v168, %v169
  %v173 = vadd.f32 %v172, %v170
  %v174 = vadd.f32 %v173, %v171
  %175 = vadd.xlane.f32.xlu0 %v174
  %v176 = vpop.xlane.xlu0 %175
  %v177 = vmul.f32 %v176, 0.001953125
  %v178 = vadd.f32 %v177, 1e-05
  %v179 = vrsqrt.pop %v178
  %v180 = vld [vmem:[%s2] sm:$0x1]
  %v181 = vld [vmem:[%s2 + $0x1] sm:$0x1]
  %v182 = vld [vmem:[%s1] sm:$0x3]
  %v184 = vsel %vm63, %v182, 0
  %186 = vmatprep.subr.bf16.mxu0 0
  %187 = vmatpush1.bf16.msra.mxu0 0
  %188 = vmatprep.subr.bf16.mxu0 0
  %189 = vmatpush1.bf16.msra.mxu0 0
  %190 = vmatprep.subr.bf16.mxu0 0
  %191 = vmatpush1.bf16.msra.mxu0 0
  %192 = vmatprep.subr.bf16.mxu0 0
  %193 = vmatpush1.bf16.msra.mxu0 0
  %194 = vmatprep.subr.bf16.mxu0 0
  %195 = vmatpush1.bf16.msra.mxu0 0
  %196 = vmatprep.subr.bf16.mxu0 0
  %197 = vmatpush1.bf16.msra.mxu0 0
  %198 = vmatprep.subr.bf16.mxu0 0
  %199 = vmatpush1.bf16.msra.mxu0 0
  %200 = vmatprep.subr.bf16.mxu0 0
  %201 = vmatpush1.bf16.msra.mxu0 %v184
  %202 = vmatprep.subr.bf16.mxu0 0
  %203 = vmatpush2.bf16.msra.mxu0 0
  %204 = vmatprep.subr.bf16.mxu0 0
  %205 = vmatpush2.bf16.msra.mxu0 0
  %206 = vmatprep.subr.bf16.mxu0 0
  %207 = vmatpush2.bf16.msra.mxu0 0
  %208 = vmatprep.subr.bf16.mxu0 0
  %209 = vmatpush2.bf16.msra.mxu0 0
  %210 = vmatprep.subr.bf16.mxu0 0
  %211 = vmatpush2.bf16.msra.mxu0 0
  %212 = vmatprep.subr.bf16.mxu0 0
  %213 = vmatpush2.bf16.msra.mxu0 0
  %214 = vmatprep.subr.bf16.mxu0 0
  %215 = vmatpush2.bf16.msra.mxu0 0
  %216 = vmatprep.subr.bf16.mxu0 0
  %217 = vmatpush2.bf16.msra.mxu0 0
  %218 = vmatprep.mubr.bf16.mxu0 0
  %219 = vmatmul.mubr.bf16.gmra.mxu0 %v61
  %v220 = vpop.f32.mrf.mxu0
  %v221 = vadd.f32 %v39, %v220
  %v222 = vpop.f32.mrf.mxu0
  %v223 = vpop.f32.mrf.mxu0
  %v224 = vpop.f32.mrf.mxu0
  %225 = vdwg.mxu0
  %v226 = vsub.f32 %v221, %v163
  %v227 = vmul.f32 %v226, %v179
  %228 = vset.pattern.permute.xlu0 1
  %229 = vperm.xlu0 %228, %v30
  %v230 = vpop.permute.xlu0 %229
  %v232 = vmul.f32 %v227, %v230
  %233 = vset.pattern.permute.xlu0 2
  %234 = vperm.xlu0 %233, %v30
  %v235 = vpop.permute.xlu0 %234
  %v237 = vadd.f32 %v232, %v235
  %vm238 = vcmp.gt.f32.partialorder %v237, 0.0
  %v239 = vmin.f32 %v237, 0.0
  %v240 = vmul.f32 %v239, 1.442695
  %v241 = vpow.pop %v240
  %v242 = vsub.f32 %v241, 1.0
  %v243 = vsel %vm238, %v237, %v242
  %v244 = vadd.s32 %v180, 4294967295
  %v245 = vadd.s32 %v181, 4294967295
  %vm246 = vcmp.ge.s32.totalorder %v244, 0
  %vm247 = vcmp.lt.s32.totalorder %v244, 16
  %vm248 = vmand %vm246, %vm247
  %vm249 = vcmp.ge.s32.totalorder %v245, 0
  %vm250 = vmand %vm248, %vm249
  %vm251 = vcmp.lt.s32.totalorder %v245, 16
  %vm252 = vmand %vm250, %vm251
  %v253 = vsel %vm252, 1, 0
  %v254 = vlaneseq
  %v255 = vshrl.u32 %v254, 7
  %v256 = vsub.s32 0, %v255
  %v257 = vrot.slane %v253, %v256
  %vm258 = vcmp.eq.s32.totalorder %v257, 1
  %v259 = vsel %vm258, %v243, 0.0
  %v260 = vld [vmem:[%s4] sm:$0xf]
  %v261 = vpack.c.bf16 %v259, %v259
  %s262 = scalar_lea.vmem %s1, 2
  %v263 = vld [vmem:[%s262] sm:$0x3]
  %v265 = vsel %vm63, %v263, 0
  %267 = vmatprep.subr.bf16.mxu0 0
  %268 = vmatpush1.bf16.msra.mxu0 0
  %269 = vmatprep.subr.bf16.mxu0 0
  %270 = vmatpush1.bf16.msra.mxu0 0
  %271 = vmatprep.subr.bf16.mxu0 0
  %272 = vmatpush1.bf16.msra.mxu0 0
  %273 = vmatprep.subr.bf16.mxu0 0
  %274 = vmatpush1.bf16.msra.mxu0 0
  %275 = vmatprep.subr.bf16.mxu0 0
  %276 = vmatpush1.bf16.msra.mxu0 0
  %277 = vmatprep.subr.bf16.mxu0 0
  %278 = vmatpush1.bf16.msra.mxu0 0
  %279 = vmatprep.subr.bf16.mxu0 0
  %280 = vmatpush1.bf16.msra.mxu0 0
  %281 = vmatprep.subr.bf16.mxu0 0
  %282 = vmatpush1.bf16.msra.mxu0 %v265
  %283 = vmatprep.subr.bf16.mxu0 0
  %284 = vmatpush2.bf16.msra.mxu0 0
  %285 = vmatprep.subr.bf16.mxu0 0
  %286 = vmatpush2.bf16.msra.mxu0 0
  %287 = vmatprep.subr.bf16.mxu0 0
  %288 = vmatpush2.bf16.msra.mxu0 0
  %289 = vmatprep.subr.bf16.mxu0 0
  %290 = vmatpush2.bf16.msra.mxu0 0
  %291 = vmatprep.subr.bf16.mxu0 0
  %292 = vmatpush2.bf16.msra.mxu0 0
  %293 = vmatprep.subr.bf16.mxu0 0
  %294 = vmatpush2.bf16.msra.mxu0 0
  %295 = vmatprep.subr.bf16.mxu0 0
  %296 = vmatpush2.bf16.msra.mxu0 0
  %297 = vmatprep.subr.bf16.mxu0 0
  %298 = vmatpush2.bf16.msra.mxu0 0
  %299 = vmatprep.mubr.bf16.mxu0 0
  %300 = vmatmul.mubr.bf16.gmra.mxu0 %v61
  %v301 = vpop.f32.mrf.mxu0
  %v302 = vadd.f32 %v39, %v301
  %v303 = vpop.f32.mrf.mxu0
  %v304 = vpop.f32.mrf.mxu0
  %v305 = vpop.f32.mrf.mxu0
  %306 = vdwg.mxu0
  %v307 = vsub.f32 %v302, %v163
  %v308 = vmul.f32 %v307, %v179
  %v309 = vmul.f32 %v308, %v230
  %v310 = vadd.f32 %v309, %v235
  %vm311 = vcmp.gt.f32.partialorder %v310, 0.0
  %v312 = vmin.f32 %v310, 0.0
  %v313 = vmul.f32 %v312, 1.442695
  %v314 = vpow.pop %v313
  %v315 = vsub.f32 %v314, 1.0
  %v316 = vsel %vm311, %v310, %v315
  %vm317 = vcmp.ge.s32.totalorder %v181, 0
  %vm318 = vmand %vm248, %vm317
  %vm319 = vcmp.lt.s32.totalorder %v181, 16
  %vm320 = vmand %vm318, %vm319
  %v321 = vsel %vm320, 1, 0
  %v322 = vlaneseq
  %v323 = vshrl.u32 %v322, 7
  %v324 = vsub.s32 0, %v323
  %v325 = vrot.slane %v321, %v324
  %vm326 = vcmp.eq.s32.totalorder %v325, 1
  %v327 = vsel %vm326, %v316, 0.0
  %s328 = scalar_lea.vmem %s4, 4
  %v329 = vld [vmem:[%s328] sm:$0xf]
  %v330 = vpack.c.bf16 %v327, %v327
  %vm331 = vcmask 64512
  %v333 = vsel %vm331, %v329, 0
  %vm335 = vcmask 1043456
  %v337 = vsel %vm335, %v330, 0
  %339 = vmatprep.subr.bf16.mxu0 0
  %340 = vmatpush1.bf16.msra.mxu0 0
  %341 = vmatprep.subr.bf16.mxu0 0
  %342 = vmatpush1.bf16.msra.mxu0 0
  %343 = vmatprep.subr.bf16.mxu0 0
  %344 = vmatpush1.bf16.msra.mxu0 0
  %345 = vmatprep.subr.bf16.mxu0 0
  %346 = vmatpush1.bf16.msra.mxu0 0
  %347 = vmatprep.subr.bf16.mxu0 0
  %348 = vmatpush1.bf16.msra.mxu0 0
  %349 = vmatprep.subr.bf16.mxu0 0
  %350 = vmatpush1.bf16.msra.mxu0 0
  %351 = vmatprep.subr.bf16.mxu0 0
  %352 = vmatpush1.bf16.msra.mxu0 0
  %353 = vmatprep.subr.bf16.mxu0 0
  %354 = vmatpush1.bf16.msra.mxu0 %v337
  %355 = vmatprep.subr.bf16.mxu0 0
  %356 = vmatpush2.bf16.msra.mxu0 0
  %357 = vmatprep.subr.bf16.mxu0 0
  %358 = vmatpush2.bf16.msra.mxu0 0
  %359 = vmatprep.subr.bf16.mxu0 0
  %360 = vmatpush2.bf16.msra.mxu0 0
  %361 = vmatprep.subr.bf16.mxu0 0
  %362 = vmatpush2.bf16.msra.mxu0 0
  %363 = vmatprep.subr.bf16.mxu0 0
  %364 = vmatpush2.bf16.msra.mxu0 0
  %365 = vmatprep.subr.bf16.mxu0 0
  %366 = vmatpush2.bf16.msra.mxu0 0
  %367 = vmatprep.subr.bf16.mxu0 0
  %368 = vmatpush2.bf16.msra.mxu0 0
  %369 = vmatprep.subr.bf16.mxu0 0
  %370 = vmatpush2.bf16.msra.mxu0 0
  %371 = vmatprep.mubr.bf16.mxu0 0
  %372 = vmatmul.mubr.bf16.gmra.mxu0 %v333
  %v373 = vpop.f32.mrf.mxu0
  %v374 = vadd.f32 0.0, %v373
  %v375 = vpop.f32.mrf.mxu0
  %v376 = vpop.f32.mrf.mxu0
  %v377 = vpop.f32.mrf.mxu0
  %378 = vdwg.mxu0
  %v380 = vsel %vm331, %v260, 0
  %v383 = vsel %vm335, %v261, 0
  %385 = vmatprep.subr.bf16.mxu0 0
  %386 = vmatpush1.bf16.msra.mxu0 0
  %387 = vmatprep.subr.bf16.mxu0 0
  %388 = vmatpush1.bf16.msra.mxu0 0
  %389 = vmatprep.subr.bf16.mxu0 0
  %390 = vmatpush1.bf16.msra.mxu0 0
  %391 = vmatprep.subr.bf16.mxu0 0
  %392 = vmatpush1.bf16.msra.mxu0 0
  %393 = vmatprep.subr.bf16.mxu0 0
  %394 = vmatpush1.bf16.msra.mxu0 0
  %395 = vmatprep.subr.bf16.mxu0 0
  %396 = vmatpush1.bf16.msra.mxu0 0
  %397 = vmatprep.subr.bf16.mxu0 0
  %398 = vmatpush1.bf16.msra.mxu0 0
  %399 = vmatprep.subr.bf16.mxu0 0
  %400 = vmatpush1.bf16.msra.mxu0 %v383
  %401 = vmatprep.subr.bf16.mxu0 0
  %402 = vmatpush2.bf16.msra.mxu0 0
  %403 = vmatprep.subr.bf16.mxu0 0
  %404 = vmatpush2.bf16.msra.mxu0 0
  %405 = vmatprep.subr.bf16.mxu0 0
  %406 = vmatpush2.bf16.msra.mxu0 0
  %407 = vmatprep.subr.bf16.mxu0 0
  %408 = vmatpush2.bf16.msra.mxu0 0
  %409 = vmatprep.subr.bf16.mxu0 0
  %410 = vmatpush2.bf16.msra.mxu0 0
  %411 = vmatprep.subr.bf16.mxu0 0
  %412 = vmatpush2.bf16.msra.mxu0 0
  %413 = vmatprep.subr.bf16.mxu0 0
  %414 = vmatpush2.bf16.msra.mxu0 0
  %415 = vmatprep.subr.bf16.mxu0 0
  %416 = vmatpush2.bf16.msra.mxu0 0
  %417 = vmatprep.mubr.bf16.mxu0 0
  %418 = vmatmul.mubr.bf16.gmra.mxu0 %v380
  %v419 = vpop.f32.mrf.mxu0
  %v420 = vadd.f32 %v374, %v419
  %v421 = vpop.f32.mrf.mxu0
  %v422 = vpop.f32.mrf.mxu0
  %v423 = vpop.f32.mrf.mxu0
  %424 = vdwg.mxu0
  %s425 = scalar_lea.vmem %s1, 4
  %v426 = vld [vmem:[%s425] sm:$0x3]
  %v428 = vsel %vm63, %v426, 0
  %430 = vmatprep.subr.bf16.mxu0 0
  %431 = vmatpush1.bf16.msra.mxu0 0
  %432 = vmatprep.subr.bf16.mxu0 0
  %433 = vmatpush1.bf16.msra.mxu0 0
  %434 = vmatprep.subr.bf16.mxu0 0
  %435 = vmatpush1.bf16.msra.mxu0 0
  %436 = vmatprep.subr.bf16.mxu0 0
  %437 = vmatpush1.bf16.msra.mxu0 0
  %438 = vmatprep.subr.bf16.mxu0 0
  %439 = vmatpush1.bf16.msra.mxu0 0
  %440 = vmatprep.subr.bf16.mxu0 0
  %441 = vmatpush1.bf16.msra.mxu0 0
  %442 = vmatprep.subr.bf16.mxu0 0
  %443 = vmatpush1.bf16.msra.mxu0 0
  %444 = vmatprep.subr.bf16.mxu0 0
  %445 = vmatpush1.bf16.msra.mxu0 %v428
  %446 = vmatprep.subr.bf16.mxu0 0
  %447 = vmatpush2.bf16.msra.mxu0 0
  %448 = vmatprep.subr.bf16.mxu0 0
  %449 = vmatpush2.bf16.msra.mxu0 0
  %450 = vmatprep.subr.bf16.mxu0 0
  %451 = vmatpush2.bf16.msra.mxu0 0
  %452 = vmatprep.subr.bf16.mxu0 0
  %453 = vmatpush2.bf16.msra.mxu0 0
  %454 = vmatprep.subr.bf16.mxu0 0
  %455 = vmatpush2.bf16.msra.mxu0 0
  %456 = vmatprep.subr.bf16.mxu0 0
  %457 = vmatpush2.bf16.msra.mxu0 0
  %458 = vmatprep.subr.bf16.mxu0 0
  %459 = vmatpush2.bf16.msra.mxu0 0
  %460 = vmatprep.subr.bf16.mxu0 0
  %461 = vmatpush2.bf16.msra.mxu0 0
  %462 = vmatprep.mubr.bf16.mxu0 0
  %463 = vmatmul.mubr.bf16.gmra.mxu0 %v61
  %v464 = vpop.f32.mrf.mxu0
  %v465 = vadd.f32 %v39, %v464
  %v466 = vpop.f32.mrf.mxu0
  %v467 = vpop.f32.mrf.mxu0
  %v468 = vpop.f32.mrf.mxu0
  %469 = vdwg.mxu0
  %v470 = vsub.f32 %v465, %v163
  %v471 = vmul.f32 %v470, %v179
  %v472 = vmul.f32 %v471, %v230
  %v473 = vadd.f32 %v472, %v235
  %vm474 = vcmp.gt.f32.partialorder %v473, 0.0
  %v475 = vmin.f32 %v473, 0.0
  %v476 = vmul.f32 %v475, 1.442695
  %v477 = vpow.pop %v476
  %v478 = vsub.f32 %v477, 1.0
  %v479 = vsel %vm474, %v473, %v478
  %v480 = vadd.s32 %v181, 1
  %vm481 = vcmp.ge.s32.totalorder %v480, 0
  %vm482 = vmand %vm248, %vm481
  %vm483 = vcmp.lt.s32.totalorder %v480, 16
  %vm484 = vmand %vm482, %vm483
  %v485 = vsel %vm484, 1, 0
  %v486 = vlaneseq
  %v487 = vshrl.u32 %v486, 7
  %v488 = vsub.s32 0, %v487
  %v489 = vrot.slane %v485, %v488
  %vm490 = vcmp.eq.s32.totalorder %v489, 1
  %v491 = vsel %vm490, %v479, 0.0
  %s492 = scalar_lea.vmem %s4, 8
  %v493 = vld [vmem:[%s492] sm:$0xf]
  %v494 = vpack.c.bf16 %v491, %v491
  %v496 = vsel %vm331, %v493, 0
  %v499 = vsel %vm335, %v494, 0
  %501 = vmatprep.subr.bf16.mxu0 0
  %502 = vmatpush1.bf16.msra.mxu0 0
  %503 = vmatprep.subr.bf16.mxu0 0
  %504 = vmatpush1.bf16.msra.mxu0 0
  %505 = vmatprep.subr.bf16.mxu0 0
  %506 = vmatpush1.bf16.msra.mxu0 0
  %507 = vmatprep.subr.bf16.mxu0 0
  %508 = vmatpush1.bf16.msra.mxu0 0
  %509 = vmatprep.subr.bf16.mxu0 0
  %510 = vmatpush1.bf16.msra.mxu0 0
  %511 = vmatprep.subr.bf16.mxu0 0
  %512 = vmatpush1.bf16.msra.mxu0 0
  %513 = vmatprep.subr.bf16.mxu0 0
  %514 = vmatpush1.bf16.msra.mxu0 0
  %515 = vmatprep.subr.bf16.mxu0 0
  %516 = vmatpush1.bf16.msra.mxu0 %v499
  %517 = vmatprep.subr.bf16.mxu0 0
  %518 = vmatpush2.bf16.msra.mxu0 0
  %519 = vmatprep.subr.bf16.mxu0 0
  %520 = vmatpush2.bf16.msra.mxu0 0
  %521 = vmatprep.subr.bf16.mxu0 0
  %522 = vmatpush2.bf16.msra.mxu0 0
  %523 = vmatprep.subr.bf16.mxu0 0
  %524 = vmatpush2.bf16.msra.mxu0 0
  %525 = vmatprep.subr.bf16.mxu0 0
  %526 = vmatpush2.bf16.msra.mxu0 0
  %527 = vmatprep.subr.bf16.mxu0 0
  %528 = vmatpush2.bf16.msra.mxu0 0
  %529 = vmatprep.subr.bf16.mxu0 0
  %530 = vmatpush2.bf16.msra.mxu0 0
  %531 = vmatprep.subr.bf16.mxu0 0
  %532 = vmatpush2.bf16.msra.mxu0 0
  %533 = vmatprep.mubr.bf16.mxu0 0
  %534 = vmatmul.mubr.bf16.gmra.mxu0 %v496
  %v535 = vpop.f32.mrf.mxu0
  %v536 = vadd.f32 0.0, %v535
  %v537 = vpop.f32.mrf.mxu0
  %v538 = vpop.f32.mrf.mxu0
  %v539 = vpop.f32.mrf.mxu0
  %540 = vdwg.mxu0
  %v541 = vadd.f32 %v420, %v536
  %s542 = scalar_lea.vmem %s1, 6
  %v543 = vld [vmem:[%s542] sm:$0x3]
  %v545 = vsel %vm63, %v543, 0
  %547 = vmatprep.subr.bf16.mxu0 0
  %548 = vmatpush1.bf16.msra.mxu0 0
  %549 = vmatprep.subr.bf16.mxu0 0
  %550 = vmatpush1.bf16.msra.mxu0 0
  %551 = vmatprep.subr.bf16.mxu0 0
  %552 = vmatpush1.bf16.msra.mxu0 0
  %553 = vmatprep.subr.bf16.mxu0 0
  %554 = vmatpush1.bf16.msra.mxu0 0
  %555 = vmatprep.subr.bf16.mxu0 0
  %556 = vmatpush1.bf16.msra.mxu0 0
  %557 = vmatprep.subr.bf16.mxu0 0
  %558 = vmatpush1.bf16.msra.mxu0 0
  %559 = vmatprep.subr.bf16.mxu0 0
  %560 = vmatpush1.bf16.msra.mxu0 0
  %561 = vmatprep.subr.bf16.mxu0 0
  %562 = vmatpush1.bf16.msra.mxu0 %v545
  %563 = vmatprep.subr.bf16.mxu0 0
  %564 = vmatpush2.bf16.msra.mxu0 0
  %565 = vmatprep.subr.bf16.mxu0 0
  %566 = vmatpush2.bf16.msra.mxu0 0
  %567 = vmatprep.subr.bf16.mxu0 0
  %568 = vmatpush2.bf16.msra.mxu0 0
  %569 = vmatprep.subr.bf16.mxu0 0
  %570 = vmatpush2.bf16.msra.mxu0 0
  %571 = vmatprep.subr.bf16.mxu0 0
  %572 = vmatpush2.bf16.msra.mxu0 0
  %573 = vmatprep.subr.bf16.mxu0 0
  %574 = vmatpush2.bf16.msra.mxu0 0
  %575 = vmatprep.subr.bf16.mxu0 0
  %576 = vmatpush2.bf16.msra.mxu0 0
  %577 = vmatprep.subr.bf16.mxu0 0
  %578 = vmatpush2.bf16.msra.mxu0 0
  %579 = vmatprep.mubr.bf16.mxu0 0
  %580 = vmatmul.mubr.bf16.gmra.mxu0 %v61
  %v581 = vpop.f32.mrf.mxu0
  %v582 = vadd.f32 %v39, %v581
  %v583 = vpop.f32.mrf.mxu0
  %v584 = vpop.f32.mrf.mxu0
  %v585 = vpop.f32.mrf.mxu0
  %586 = vdwg.mxu0
  %v587 = vsub.f32 %v582, %v163
  %v588 = vmul.f32 %v587, %v179
  %v589 = vmul.f32 %v588, %v230
  %v590 = vadd.f32 %v589, %v235
  %vm591 = vcmp.gt.f32.partialorder %v590, 0.0
  %v592 = vmin.f32 %v590, 0.0
  %v593 = vmul.f32 %v592, 1.442695
  %v594 = vpow.pop %v593
  %v595 = vsub.f32 %v594, 1.0
  %v596 = vsel %vm591, %v590, %v595
  %vm597 = vcmp.ge.s32.totalorder %v180, 0
  %vm598 = vcmp.lt.s32.totalorder %v180, 16
  %vm599 = vmand %vm597, %vm598
  %vm600 = vmand %vm599, %vm249
  %vm601 = vmand %vm600, %vm251
  %v602 = vsel %vm601, 1, 0
  %v603 = vlaneseq
  %v604 = vshrl.u32 %v603, 7
  %v605 = vsub.s32 0, %v604
  %v606 = vrot.slane %v602, %v605
  %vm607 = vcmp.eq.s32.totalorder %v606, 1
  %v608 = vsel %vm607, %v596, 0.0
  %s609 = scalar_lea.vmem %s4, 12
  %v610 = vld [vmem:[%s609] sm:$0xf]
  %v611 = vpack.c.bf16 %v608, %v608
  %v613 = vsel %vm331, %v610, 0
  %v616 = vsel %vm335, %v611, 0
  %618 = vmatprep.subr.bf16.mxu0 0
  %619 = vmatpush1.bf16.msra.mxu0 0
  %620 = vmatprep.subr.bf16.mxu0 0
  %621 = vmatpush1.bf16.msra.mxu0 0
  %622 = vmatprep.subr.bf16.mxu0 0
  %623 = vmatpush1.bf16.msra.mxu0 0
  %624 = vmatprep.subr.bf16.mxu0 0
  %625 = vmatpush1.bf16.msra.mxu0 0
  %626 = vmatprep.subr.bf16.mxu0 0
  %627 = vmatpush1.bf16.msra.mxu0 0
  %628 = vmatprep.subr.bf16.mxu0 0
  %629 = vmatpush1.bf16.msra.mxu0 0
  %630 = vmatprep.subr.bf16.mxu0 0
  %631 = vmatpush1.bf16.msra.mxu0 0
  %632 = vmatprep.subr.bf16.mxu0 0
  %633 = vmatpush1.bf16.msra.mxu0 %v616
  %634 = vmatprep.subr.bf16.mxu0 0
  %635 = vmatpush2.bf16.msra.mxu0 0
  %636 = vmatprep.subr.bf16.mxu0 0
  %637 = vmatpush2.bf16.msra.mxu0 0
  %638 = vmatprep.subr.bf16.mxu0 0
  %639 = vmatpush2.bf16.msra.mxu0 0
  %640 = vmatprep.subr.bf16.mxu0 0
  %641 = vmatpush2.bf16.msra.mxu0 0
  %642 = vmatprep.subr.bf16.mxu0 0
  %643 = vmatpush2.bf16.msra.mxu0 0
  %644 = vmatprep.subr.bf16.mxu0 0
  %645 = vmatpush2.bf16.msra.mxu0 0
  %646 = vmatprep.subr.bf16.mxu0 0
  %647 = vmatpush2.bf16.msra.mxu0 0
  %648 = vmatprep.subr.bf16.mxu0 0
  %649 = vmatpush2.bf16.msra.mxu0 0
  %650 = vmatprep.mubr.bf16.mxu0 0
  %651 = vmatmul.mubr.bf16.gmra.mxu0 %v613
  %v652 = vpop.f32.mrf.mxu0
  %v653 = vadd.f32 0.0, %v652
  %v654 = vpop.f32.mrf.mxu0
  %v655 = vpop.f32.mrf.mxu0
  %v656 = vpop.f32.mrf.mxu0
  %657 = vdwg.mxu0
  %v658 = vadd.f32 %v541, %v653
  %s659 = scalar_lea.vmem %s1, 8
  %v660 = vld [vmem:[%s659] sm:$0x3]
  %v662 = vsel %vm63, %v660, 0
  %664 = vmatprep.subr.bf16.mxu0 0
  %665 = vmatpush1.bf16.msra.mxu0 0
  %666 = vmatprep.subr.bf16.mxu0 0
  %667 = vmatpush1.bf16.msra.mxu0 0
  %668 = vmatprep.subr.bf16.mxu0 0
  %669 = vmatpush1.bf16.msra.mxu0 0
  %670 = vmatprep.subr.bf16.mxu0 0
  %671 = vmatpush1.bf16.msra.mxu0 0
  %672 = vmatprep.subr.bf16.mxu0 0
  %673 = vmatpush1.bf16.msra.mxu0 0
  %674 = vmatprep.subr.bf16.mxu0 0
  %675 = vmatpush1.bf16.msra.mxu0 0
  %676 = vmatprep.subr.bf16.mxu0 0
  %677 = vmatpush1.bf16.msra.mxu0 0
  %678 = vmatprep.subr.bf16.mxu0 0
  %679 = vmatpush1.bf16.msra.mxu0 %v662
  %680 = vmatprep.subr.bf16.mxu0 0
  %681 = vmatpush2.bf16.msra.mxu0 0
  %682 = vmatprep.subr.bf16.mxu0 0
  %683 = vmatpush2.bf16.msra.mxu0 0
  %684 = vmatprep.subr.bf16.mxu0 0
  %685 = vmatpush2.bf16.msra.mxu0 0
  %686 = vmatprep.subr.bf16.mxu0 0
  %687 = vmatpush2.bf16.msra.mxu0 0
  %688 = vmatprep.subr.bf16.mxu0 0
  %689 = vmatpush2.bf16.msra.mxu0 0
  %690 = vmatprep.subr.bf16.mxu0 0
  %691 = vmatpush2.bf16.msra.mxu0 0
  %692 = vmatprep.subr.bf16.mxu0 0
  %693 = vmatpush2.bf16.msra.mxu0 0
  %694 = vmatprep.subr.bf16.mxu0 0
  %695 = vmatpush2.bf16.msra.mxu0 0
  %696 = vmatprep.mubr.bf16.mxu0 0
  %697 = vmatmul.mubr.bf16.gmra.mxu0 %v61
  %v698 = vpop.f32.mrf.mxu0
  %v699 = vadd.f32 %v39, %v698
  %v700 = vpop.f32.mrf.mxu0
  %v701 = vpop.f32.mrf.mxu0
  %v702 = vpop.f32.mrf.mxu0
  %703 = vdwg.mxu0
  %v704 = vsub.f32 %v699, %v163
  %v705 = vmul.f32 %v704, %v179
  %v706 = vmul.f32 %v705, %v230
  %v707 = vadd.f32 %v706, %v235
  %vm708 = vcmp.gt.f32.partialorder %v707, 0.0
  %v709 = vmin.f32 %v707, 0.0
  %v710 = vmul.f32 %v709, 1.442695
  %v711 = vpow.pop %v710
  %v712 = vsub.f32 %v711, 1.0
  %v713 = vsel %vm708, %v707, %v712
  %vm714 = vmand %vm599, %vm317
  %vm715 = vmand %vm714, %vm319
  %v716 = vsel %vm715, 1, 0
  %v717 = vlaneseq
  %v718 = vshrl.u32 %v717, 7
  %v719 = vsub.s32 0, %v718
  %v720 = vrot.slane %v716, %v719
  %vm721 = vcmp.eq.s32.totalorder %v720, 1
  %v722 = vsel %vm721, %v713, 0.0
  %s723 = scalar_lea.vmem %s4, 16
  %v724 = vld [vmem:[%s723] sm:$0xf]
  %v725 = vpack.c.bf16 %v722, %v722
  %v727 = vsel %vm331, %v724, 0
  %v730 = vsel %vm335, %v725, 0
  %732 = vmatprep.subr.bf16.mxu0 0
  %733 = vmatpush1.bf16.msra.mxu0 0
  %734 = vmatprep.subr.bf16.mxu0 0
  %735 = vmatpush1.bf16.msra.mxu0 0
  %736 = vmatprep.subr.bf16.mxu0 0
  %737 = vmatpush1.bf16.msra.mxu0 0
  %738 = vmatprep.subr.bf16.mxu0 0
  %739 = vmatpush1.bf16.msra.mxu0 0
  %740 = vmatprep.subr.bf16.mxu0 0
  %741 = vmatpush1.bf16.msra.mxu0 0
  %742 = vmatprep.subr.bf16.mxu0 0
  %743 = vmatpush1.bf16.msra.mxu0 0
  %744 = vmatprep.subr.bf16.mxu0 0
  %745 = vmatpush1.bf16.msra.mxu0 0
  %746 = vmatprep.subr.bf16.mxu0 0
  %747 = vmatpush1.bf16.msra.mxu0 %v730
  %748 = vmatprep.subr.bf16.mxu0 0
  %749 = vmatpush2.bf16.msra.mxu0 0
  %750 = vmatprep.subr.bf16.mxu0 0
  %751 = vmatpush2.bf16.msra.mxu0 0
  %752 = vmatprep.subr.bf16.mxu0 0
  %753 = vmatpush2.bf16.msra.mxu0 0
  %754 = vmatprep.subr.bf16.mxu0 0
  %755 = vmatpush2.bf16.msra.mxu0 0
  %756 = vmatprep.subr.bf16.mxu0 0
  %757 = vmatpush2.bf16.msra.mxu0 0
  %758 = vmatprep.subr.bf16.mxu0 0
  %759 = vmatpush2.bf16.msra.mxu0 0
  %760 = vmatprep.subr.bf16.mxu0 0
  %761 = vmatpush2.bf16.msra.mxu0 0
  %762 = vmatprep.subr.bf16.mxu0 0
  %763 = vmatpush2.bf16.msra.mxu0 0
  %764 = vmatprep.mubr.bf16.mxu0 0
  %765 = vmatmul.mubr.bf16.gmra.mxu0 %v727
  %v766 = vpop.f32.mrf.mxu0
  %v767 = vadd.f32 0.0, %v766
  %v768 = vpop.f32.mrf.mxu0
  %v769 = vpop.f32.mrf.mxu0
  %v770 = vpop.f32.mrf.mxu0
  %771 = vdwg.mxu0
  %v772 = vadd.f32 %v658, %v767
  %s773 = scalar_lea.vmem %s1, 10
  %v774 = vld [vmem:[%s773] sm:$0x3]
  %v776 = vsel %vm63, %v774, 0
  %778 = vmatprep.subr.bf16.mxu0 0
  %779 = vmatpush1.bf16.msra.mxu0 0
  %780 = vmatprep.subr.bf16.mxu0 0
  %781 = vmatpush1.bf16.msra.mxu0 0
  %782 = vmatprep.subr.bf16.mxu0 0
  %783 = vmatpush1.bf16.msra.mxu0 0
  %784 = vmatprep.subr.bf16.mxu0 0
  %785 = vmatpush1.bf16.msra.mxu0 0
  %786 = vmatprep.subr.bf16.mxu0 0
  %787 = vmatpush1.bf16.msra.mxu0 0
  %788 = vmatprep.subr.bf16.mxu0 0
  %789 = vmatpush1.bf16.msra.mxu0 0
  %790 = vmatprep.subr.bf16.mxu0 0
  %791 = vmatpush1.bf16.msra.mxu0 0
  %792 = vmatprep.subr.bf16.mxu0 0
  %793 = vmatpush1.bf16.msra.mxu0 %v776
  %794 = vmatprep.subr.bf16.mxu0 0
  %795 = vmatpush2.bf16.msra.mxu0 0
  %796 = vmatprep.subr.bf16.mxu0 0
  %797 = vmatpush2.bf16.msra.mxu0 0
  %798 = vmatprep.subr.bf16.mxu0 0
  %799 = vmatpush2.bf16.msra.mxu0 0
  %800 = vmatprep.subr.bf16.mxu0 0
  %801 = vmatpush2.bf16.msra.mxu0 0
  %802 = vmatprep.subr.bf16.mxu0 0
  %803 = vmatpush2.bf16.msra.mxu0 0
  %804 = vmatprep.subr.bf16.mxu0 0
  %805 = vmatpush2.bf16.msra.mxu0 0
  %806 = vmatprep.subr.bf16.mxu0 0
  %807 = vmatpush2.bf16.msra.mxu0 0
  %808 = vmatprep.subr.bf16.mxu0 0
  %809 = vmatpush2.bf16.msra.mxu0 0
  %810 = vmatprep.mubr.bf16.mxu0 0
  %811 = vmatmul.mubr.bf16.gmra.mxu0 %v61
  %v812 = vpop.f32.mrf.mxu0
  %v813 = vadd.f32 %v39, %v812
  %v814 = vpop.f32.mrf.mxu0
  %v815 = vpop.f32.mrf.mxu0
  %v816 = vpop.f32.mrf.mxu0
  %817 = vdwg.mxu0
  %v818 = vsub.f32 %v813, %v163
  %v819 = vmul.f32 %v818, %v179
  %v820 = vmul.f32 %v819, %v230
  %v821 = vadd.f32 %v820, %v235
  %vm822 = vcmp.gt.f32.partialorder %v821, 0.0
  %v823 = vmin.f32 %v821, 0.0
  %v824 = vmul.f32 %v823, 1.442695
  %v825 = vpow.pop %v824
  %v826 = vsub.f32 %v825, 1.0
  %v827 = vsel %vm822, %v821, %v826
  %vm828 = vmand %vm599, %vm481
  %vm829 = vmand %vm828, %vm483
  %v830 = vsel %vm829, 1, 0
  %v831 = vlaneseq
  %v832 = vshrl.u32 %v831, 7
  %v833 = vsub.s32 0, %v832
  %v834 = vrot.slane %v830, %v833
  %vm835 = vcmp.eq.s32.totalorder %v834, 1
  %v836 = vsel %vm835, %v827, 0.0
  %s837 = scalar_lea.vmem %s4, 20
  %v838 = vld [vmem:[%s837] sm:$0xf]
  %v839 = vpack.c.bf16 %v836, %v836
  %v841 = vsel %vm331, %v838, 0
  %v844 = vsel %vm335, %v839, 0
  %846 = vmatprep.subr.bf16.mxu0 0
  %847 = vmatpush1.bf16.msra.mxu0 0
  %848 = vmatprep.subr.bf16.mxu0 0
  %849 = vmatpush1.bf16.msra.mxu0 0
  %850 = vmatprep.subr.bf16.mxu0 0
  %851 = vmatpush1.bf16.msra.mxu0 0
  %852 = vmatprep.subr.bf16.mxu0 0
  %853 = vmatpush1.bf16.msra.mxu0 0
  %854 = vmatprep.subr.bf16.mxu0 0
  %855 = vmatpush1.bf16.msra.mxu0 0
  %856 = vmatprep.subr.bf16.mxu0 0
  %857 = vmatpush1.bf16.msra.mxu0 0
  %858 = vmatprep.subr.bf16.mxu0 0
  %859 = vmatpush1.bf16.msra.mxu0 0
  %860 = vmatprep.subr.bf16.mxu0 0
  %861 = vmatpush1.bf16.msra.mxu0 %v844
  %862 = vmatprep.subr.bf16.mxu0 0
  %863 = vmatpush2.bf16.msra.mxu0 0
  %864 = vmatprep.subr.bf16.mxu0 0
  %865 = vmatpush2.bf16.msra.mxu0 0
  %866 = vmatprep.subr.bf16.mxu0 0
  %867 = vmatpush2.bf16.msra.mxu0 0
  %868 = vmatprep.subr.bf16.mxu0 0
  %869 = vmatpush2.bf16.msra.mxu0 0
  %870 = vmatprep.subr.bf16.mxu0 0
  %871 = vmatpush2.bf16.msra.mxu0 0
  %872 = vmatprep.subr.bf16.mxu0 0
  %873 = vmatpush2.bf16.msra.mxu0 0
  %874 = vmatprep.subr.bf16.mxu0 0
  %875 = vmatpush2.bf16.msra.mxu0 0
  %876 = vmatprep.subr.bf16.mxu0 0
  %877 = vmatpush2.bf16.msra.mxu0 0
  %878 = vmatprep.mubr.bf16.mxu0 0
  %879 = vmatmul.mubr.bf16.gmra.mxu0 %v841
  %v880 = vpop.f32.mrf.mxu0
  %v881 = vadd.f32 0.0, %v880
  %v882 = vpop.f32.mrf.mxu0
  %v883 = vpop.f32.mrf.mxu0
  %v884 = vpop.f32.mrf.mxu0
  %885 = vdwg.mxu0
  %v886 = vadd.f32 %v772, %v881
  %s887 = scalar_lea.vmem %s1, 12
  %v888 = vld [vmem:[%s887] sm:$0x3]
  %v890 = vsel %vm63, %v888, 0
  %892 = vmatprep.subr.bf16.mxu0 0
  %893 = vmatpush1.bf16.msra.mxu0 0
  %894 = vmatprep.subr.bf16.mxu0 0
  %895 = vmatpush1.bf16.msra.mxu0 0
  %896 = vmatprep.subr.bf16.mxu0 0
  %897 = vmatpush1.bf16.msra.mxu0 0
  %898 = vmatprep.subr.bf16.mxu0 0
  %899 = vmatpush1.bf16.msra.mxu0 0
  %900 = vmatprep.subr.bf16.mxu0 0
  %901 = vmatpush1.bf16.msra.mxu0 0
  %902 = vmatprep.subr.bf16.mxu0 0
  %903 = vmatpush1.bf16.msra.mxu0 0
  %904 = vmatprep.subr.bf16.mxu0 0
  %905 = vmatpush1.bf16.msra.mxu0 0
  %906 = vmatprep.subr.bf16.mxu0 0
  %907 = vmatpush1.bf16.msra.mxu0 %v890
  %908 = vmatprep.subr.bf16.mxu0 0
  %909 = vmatpush2.bf16.msra.mxu0 0
  %910 = vmatprep.subr.bf16.mxu0 0
  %911 = vmatpush2.bf16.msra.mxu0 0
  %912 = vmatprep.subr.bf16.mxu0 0
  %913 = vmatpush2.bf16.msra.mxu0 0
  %914 = vmatprep.subr.bf16.mxu0 0
  %915 = vmatpush2.bf16.msra.mxu0 0
  %916 = vmatprep.subr.bf16.mxu0 0
  %917 = vmatpush2.bf16.msra.mxu0 0
  %918 = vmatprep.subr.bf16.mxu0 0
  %919 = vmatpush2.bf16.msra.mxu0 0
  %920 = vmatprep.subr.bf16.mxu0 0
  %921 = vmatpush2.bf16.msra.mxu0 0
  %922 = vmatprep.subr.bf16.mxu0 0
  %923 = vmatpush2.bf16.msra.mxu0 0
  %924 = vmatprep.mubr.bf16.mxu0 0
  %925 = vmatmul.mubr.bf16.gmra.mxu0 %v61
  %v926 = vpop.f32.mrf.mxu0
  %v927 = vadd.f32 %v39, %v926
  %v928 = vpop.f32.mrf.mxu0
  %v929 = vpop.f32.mrf.mxu0
  %v930 = vpop.f32.mrf.mxu0
  %931 = vdwg.mxu0
  %v932 = vsub.f32 %v927, %v163
  %v933 = vmul.f32 %v932, %v179
  %v934 = vmul.f32 %v933, %v230
  %v935 = vadd.f32 %v934, %v235
  %vm936 = vcmp.gt.f32.partialorder %v935, 0.0
  %v937 = vmin.f32 %v935, 0.0
  %v938 = vmul.f32 %v937, 1.442695
  %v939 = vpow.pop %v938
  %v940 = vsub.f32 %v939, 1.0
  %v941 = vsel %vm936, %v935, %v940
  %v942 = vadd.s32 %v180, 1
  %vm943 = vcmp.ge.s32.totalorder %v942, 0
  %vm944 = vcmp.lt.s32.totalorder %v942, 16
  %vm945 = vmand %vm943, %vm944
  %vm946 = vmand %vm945, %vm249
  %vm947 = vmand %vm946, %vm251
  %v948 = vsel %vm947, 1, 0
  %v949 = vlaneseq
  %v950 = vshrl.u32 %v949, 7
  %v951 = vsub.s32 0, %v950
  %v952 = vrot.slane %v948, %v951
  %vm953 = vcmp.eq.s32.totalorder %v952, 1
  %v954 = vsel %vm953, %v941, 0.0
  %s955 = scalar_lea.vmem %s4, 24
  %v956 = vld [vmem:[%s955] sm:$0xf]
  %v957 = vpack.c.bf16 %v954, %v954
  %v959 = vsel %vm331, %v956, 0
  %v962 = vsel %vm335, %v957, 0
  %964 = vmatprep.subr.bf16.mxu0 0
  %965 = vmatpush1.bf16.msra.mxu0 0
  %966 = vmatprep.subr.bf16.mxu0 0
  %967 = vmatpush1.bf16.msra.mxu0 0
  %968 = vmatprep.subr.bf16.mxu0 0
  %969 = vmatpush1.bf16.msra.mxu0 0
  %970 = vmatprep.subr.bf16.mxu0 0
  %971 = vmatpush1.bf16.msra.mxu0 0
  %972 = vmatprep.subr.bf16.mxu0 0
  %973 = vmatpush1.bf16.msra.mxu0 0
  %974 = vmatprep.subr.bf16.mxu0 0
  %975 = vmatpush1.bf16.msra.mxu0 0
  %976 = vmatprep.subr.bf16.mxu0 0
  %977 = vmatpush1.bf16.msra.mxu0 0
  %978 = vmatprep.subr.bf16.mxu0 0
  %979 = vmatpush1.bf16.msra.mxu0 %v962
  %980 = vmatprep.subr.bf16.mxu0 0
  %981 = vmatpush2.bf16.msra.mxu0 0
  %982 = vmatprep.subr.bf16.mxu0 0
  %983 = vmatpush2.bf16.msra.mxu0 0
  %984 = vmatprep.subr.bf16.mxu0 0
  %985 = vmatpush2.bf16.msra.mxu0 0
  %986 = vmatprep.subr.bf16.mxu0 0
  %987 = vmatpush2.bf16.msra.mxu0 0
  %988 = vmatprep.subr.bf16.mxu0 0
  %989 = vmatpush2.bf16.msra.mxu0 0
  %990 = vmatprep.subr.bf16.mxu0 0
  %991 = vmatpush2.bf16.msra.mxu0 0
  %992 = vmatprep.subr.bf16.mxu0 0
  %993 = vmatpush2.bf16.msra.mxu0 0
  %994 = vmatprep.subr.bf16.mxu0 0
  %995 = vmatpush2.bf16.msra.mxu0 0
  %996 = vmatprep.mubr.bf16.mxu0 0
  %997 = vmatmul.mubr.bf16.gmra.mxu0 %v959
  %v998 = vpop.f32.mrf.mxu0
  %v999 = vadd.f32 0.0, %v998
  %v1000 = vpop.f32.mrf.mxu0
  %v1001 = vpop.f32.mrf.mxu0
  %v1002 = vpop.f32.mrf.mxu0
  %1003 = vdwg.mxu0
  %v1004 = vadd.f32 %v886, %v999
  %s1005 = scalar_lea.vmem %s1, 14
  %v1006 = vld [vmem:[%s1005] sm:$0x3]
  %v1008 = vsel %vm63, %v1006, 0
  %1010 = vmatprep.subr.bf16.mxu0 0
  %1011 = vmatpush1.bf16.msra.mxu0 0
  %1012 = vmatprep.subr.bf16.mxu0 0
  %1013 = vmatpush1.bf16.msra.mxu0 0
  %1014 = vmatprep.subr.bf16.mxu0 0
  %1015 = vmatpush1.bf16.msra.mxu0 0
  %1016 = vmatprep.subr.bf16.mxu0 0
  %1017 = vmatpush1.bf16.msra.mxu0 0
  %1018 = vmatprep.subr.bf16.mxu0 0
  %1019 = vmatpush1.bf16.msra.mxu0 0
  %1020 = vmatprep.subr.bf16.mxu0 0
  %1021 = vmatpush1.bf16.msra.mxu0 0
  %1022 = vmatprep.subr.bf16.mxu0 0
  %1023 = vmatpush1.bf16.msra.mxu0 0
  %1024 = vmatprep.subr.bf16.mxu0 0
  %1025 = vmatpush1.bf16.msra.mxu0 %v1008
  %1026 = vmatprep.subr.bf16.mxu0 0
  %1027 = vmatpush2.bf16.msra.mxu0 0
  %1028 = vmatprep.subr.bf16.mxu0 0
  %1029 = vmatpush2.bf16.msra.mxu0 0
  %1030 = vmatprep.subr.bf16.mxu0 0
  %1031 = vmatpush2.bf16.msra.mxu0 0
  %1032 = vmatprep.subr.bf16.mxu0 0
  %1033 = vmatpush2.bf16.msra.mxu0 0
  %1034 = vmatprep.subr.bf16.mxu0 0
  %1035 = vmatpush2.bf16.msra.mxu0 0
  %1036 = vmatprep.subr.bf16.mxu0 0
  %1037 = vmatpush2.bf16.msra.mxu0 0
  %1038 = vmatprep.subr.bf16.mxu0 0
  %1039 = vmatpush2.bf16.msra.mxu0 0
  %1040 = vmatprep.subr.bf16.mxu0 0
  %1041 = vmatpush2.bf16.msra.mxu0 0
  %1042 = vmatprep.mubr.bf16.mxu0 0
  %1043 = vmatmul.mubr.bf16.gmra.mxu0 %v61
  %v1044 = vpop.f32.mrf.mxu0
  %v1045 = vadd.f32 %v39, %v1044
  %v1046 = vpop.f32.mrf.mxu0
  %v1047 = vpop.f32.mrf.mxu0
  %v1048 = vpop.f32.mrf.mxu0
  %1049 = vdwg.mxu0
  %v1050 = vsub.f32 %v1045, %v163
  %v1051 = vmul.f32 %v1050, %v179
  %v1052 = vmul.f32 %v1051, %v230
  %v1053 = vadd.f32 %v1052, %v235
  %vm1054 = vcmp.gt.f32.partialorder %v1053, 0.0
  %v1055 = vmin.f32 %v1053, 0.0
  %v1056 = vmul.f32 %v1055, 1.442695
  %v1057 = vpow.pop %v1056
  %v1058 = vsub.f32 %v1057, 1.0
  %v1059 = vsel %vm1054, %v1053, %v1058
  %vm1060 = vmand %vm945, %vm317
  %vm1061 = vmand %vm1060, %vm319
  %v1062 = vsel %vm1061, 1, 0
  %v1063 = vlaneseq
  %v1064 = vshrl.u32 %v1063, 7
  %v1065 = vsub.s32 0, %v1064
  %v1066 = vrot.slane %v1062, %v1065
  %vm1067 = vcmp.eq.s32.totalorder %v1066, 1
  %v1068 = vsel %vm1067, %v1059, 0.0
  %s1069 = scalar_lea.vmem %s4, 28
  %v1070 = vld [vmem:[%s1069] sm:$0xf]
  %v1071 = vpack.c.bf16 %v1068, %v1068
  %v1073 = vsel %vm331, %v1070, 0
  %v1076 = vsel %vm335, %v1071, 0
  %1078 = vmatprep.subr.bf16.mxu0 0
  %1079 = vmatpush1.bf16.msra.mxu0 0
  %1080 = vmatprep.subr.bf16.mxu0 0
  %1081 = vmatpush1.bf16.msra.mxu0 0
  %1082 = vmatprep.subr.bf16.mxu0 0
  %1083 = vmatpush1.bf16.msra.mxu0 0
  %1084 = vmatprep.subr.bf16.mxu0 0
  %1085 = vmatpush1.bf16.msra.mxu0 0
  %1086 = vmatprep.subr.bf16.mxu0 0
  %1087 = vmatpush1.bf16.msra.mxu0 0
  %1088 = vmatprep.subr.bf16.mxu0 0
  %1089 = vmatpush1.bf16.msra.mxu0 0
  %1090 = vmatprep.subr.bf16.mxu0 0
  %1091 = vmatpush1.bf16.msra.mxu0 0
  %1092 = vmatprep.subr.bf16.mxu0 0
  %1093 = vmatpush1.bf16.msra.mxu0 %v1076
  %1094 = vmatprep.subr.bf16.mxu0 0
  %1095 = vmatpush2.bf16.msra.mxu0 0
  %1096 = vmatprep.subr.bf16.mxu0 0
  %1097 = vmatpush2.bf16.msra.mxu0 0
  %1098 = vmatprep.subr.bf16.mxu0 0
  %1099 = vmatpush2.bf16.msra.mxu0 0
  %1100 = vmatprep.subr.bf16.mxu0 0
  %1101 = vmatpush2.bf16.msra.mxu0 0
  %1102 = vmatprep.subr.bf16.mxu0 0
  %1103 = vmatpush2.bf16.msra.mxu0 0
  %1104 = vmatprep.subr.bf16.mxu0 0
  %1105 = vmatpush2.bf16.msra.mxu0 0
  %1106 = vmatprep.subr.bf16.mxu0 0
  %1107 = vmatpush2.bf16.msra.mxu0 0
  %1108 = vmatprep.subr.bf16.mxu0 0
  %1109 = vmatpush2.bf16.msra.mxu0 0
  %1110 = vmatprep.mubr.bf16.mxu0 0
  %1111 = vmatmul.mubr.bf16.gmra.mxu0 %v1073
  %v1112 = vpop.f32.mrf.mxu0
  %v1113 = vadd.f32 0.0, %v1112
  %v1114 = vpop.f32.mrf.mxu0
  %v1115 = vpop.f32.mrf.mxu0
  %v1116 = vpop.f32.mrf.mxu0
  %1117 = vdwg.mxu0
  %v1118 = vadd.f32 %v1004, %v1113
  %s1119 = scalar_lea.vmem %s1, 16
  %v1120 = vld [vmem:[%s1119] sm:$0x3]
  %v1122 = vsel %vm63, %v1120, 0
  %1124 = vmatprep.subr.bf16.mxu0 0
  %1125 = vmatpush1.bf16.msra.mxu0 0
  %1126 = vmatprep.subr.bf16.mxu0 0
  %1127 = vmatpush1.bf16.msra.mxu0 0
  %1128 = vmatprep.subr.bf16.mxu0 0
  %1129 = vmatpush1.bf16.msra.mxu0 0
  %1130 = vmatprep.subr.bf16.mxu0 0
  %1131 = vmatpush1.bf16.msra.mxu0 0
  %1132 = vmatprep.subr.bf16.mxu0 0
  %1133 = vmatpush1.bf16.msra.mxu0 0
  %1134 = vmatprep.subr.bf16.mxu0 0
  %1135 = vmatpush1.bf16.msra.mxu0 0
  %1136 = vmatprep.subr.bf16.mxu0 0
  %1137 = vmatpush1.bf16.msra.mxu0 0
  %1138 = vmatprep.subr.bf16.mxu0 0
  %1139 = vmatpush1.bf16.msra.mxu0 %v1122
  %1140 = vmatprep.subr.bf16.mxu0 0
  %1141 = vmatpush2.bf16.msra.mxu0 0
  %1142 = vmatprep.subr.bf16.mxu0 0
  %1143 = vmatpush2.bf16.msra.mxu0 0
  %1144 = vmatprep.subr.bf16.mxu0 0
  %1145 = vmatpush2.bf16.msra.mxu0 0
  %1146 = vmatprep.subr.bf16.mxu0 0
  %1147 = vmatpush2.bf16.msra.mxu0 0
  %1148 = vmatprep.subr.bf16.mxu0 0
  %1149 = vmatpush2.bf16.msra.mxu0 0
  %1150 = vmatprep.subr.bf16.mxu0 0
  %1151 = vmatpush2.bf16.msra.mxu0 0
  %1152 = vmatprep.subr.bf16.mxu0 0
  %1153 = vmatpush2.bf16.msra.mxu0 0
  %1154 = vmatprep.subr.bf16.mxu0 0
  %1155 = vmatpush2.bf16.msra.mxu0 0
  %1156 = vmatprep.mubr.bf16.mxu0 0
  %1157 = vmatmul.mubr.bf16.gmra.mxu0 %v61
  %v1158 = vpop.f32.mrf.mxu0
  %v1159 = vadd.f32 %v39, %v1158
  %v1160 = vpop.f32.mrf.mxu0
  %v1161 = vpop.f32.mrf.mxu0
  %v1162 = vpop.f32.mrf.mxu0
  %1163 = vdwg.mxu0
  %v1164 = vsub.f32 %v1159, %v163
  %v1165 = vmul.f32 %v1164, %v179
  %v1166 = vmul.f32 %v1165, %v230
  %v1167 = vadd.f32 %v1166, %v235
  %vm1168 = vcmp.gt.f32.partialorder %v1167, 0.0
  %v1169 = vmin.f32 %v1167, 0.0
  %v1170 = vmul.f32 %v1169, 1.442695
  %v1171 = vpow.pop %v1170
  %v1172 = vsub.f32 %v1171, 1.0
  %v1173 = vsel %vm1168, %v1167, %v1172
  %vm1174 = vmand %vm945, %vm481
  %vm1175 = vmand %vm1174, %vm483
  %v1176 = vsel %vm1175, 1, 0
  %v1177 = vlaneseq
  %v1178 = vshrl.u32 %v1177, 7
  %v1179 = vsub.s32 0, %v1178
  %v1180 = vrot.slane %v1176, %v1179
  %vm1181 = vcmp.eq.s32.totalorder %v1180, 1
  %v1182 = vsel %vm1181, %v1173, 0.0
  %s1183 = scalar_lea.vmem %s4, 32
  %v1184 = vld [vmem:[%s1183] sm:$0xf]
  %v1185 = vpack.c.bf16 %v1182, %v1182
  %v1187 = vsel %vm331, %v1184, 0
  %v1190 = vsel %vm335, %v1185, 0
  %1192 = vmatprep.subr.bf16.mxu0 0
  %1193 = vmatpush1.bf16.msra.mxu0 0
  %1194 = vmatprep.subr.bf16.mxu0 0
  %1195 = vmatpush1.bf16.msra.mxu0 0
  %1196 = vmatprep.subr.bf16.mxu0 0
  %1197 = vmatpush1.bf16.msra.mxu0 0
  %1198 = vmatprep.subr.bf16.mxu0 0
  %1199 = vmatpush1.bf16.msra.mxu0 0
  %1200 = vmatprep.subr.bf16.mxu0 0
  %1201 = vmatpush1.bf16.msra.mxu0 0
  %1202 = vmatprep.subr.bf16.mxu0 0
  %1203 = vmatpush1.bf16.msra.mxu0 0
  %1204 = vmatprep.subr.bf16.mxu0 0
  %1205 = vmatpush1.bf16.msra.mxu0 0
  %1206 = vmatprep.subr.bf16.mxu0 0
  %1207 = vmatpush1.bf16.msra.mxu0 %v1190
  %1208 = vmatprep.subr.bf16.mxu0 0
  %1209 = vmatpush2.bf16.msra.mxu0 0
  %1210 = vmatprep.subr.bf16.mxu0 0
  %1211 = vmatpush2.bf16.msra.mxu0 0
  %1212 = vmatprep.subr.bf16.mxu0 0
  %1213 = vmatpush2.bf16.msra.mxu0 0
  %1214 = vmatprep.subr.bf16.mxu0 0
  %1215 = vmatpush2.bf16.msra.mxu0 0
  %1216 = vmatprep.subr.bf16.mxu0 0
  %1217 = vmatpush2.bf16.msra.mxu0 0
  %1218 = vmatprep.subr.bf16.mxu0 0
  %1219 = vmatpush2.bf16.msra.mxu0 0
  %1220 = vmatprep.subr.bf16.mxu0 0
  %1221 = vmatpush2.bf16.msra.mxu0 0
  %1222 = vmatprep.subr.bf16.mxu0 0
  %1223 = vmatpush2.bf16.msra.mxu0 0
  %1224 = vmatprep.mubr.bf16.mxu0 0
  %1225 = vmatmul.mubr.bf16.gmra.mxu0 %v1187
  %v1226 = vpop.f32.mrf.mxu0
  %v1227 = vadd.f32 0.0, %v1226
  %v1228 = vpop.f32.mrf.mxu0
  %v1229 = vpop.f32.mrf.mxu0
  %v1230 = vpop.f32.mrf.mxu0
  %1231 = vdwg.mxu0
  %v1232 = vadd.f32 %v1118, %v1227
  %1233 = vset.pattern.permute.xlu0 3
  %1234 = vperm.xlu0 %1233, %v30
  %v1235 = vpop.permute.xlu0 %1234
  %v1237 = vadd.f32 %v1232, %v1235
  %1238 = vadd.xlane.f32.xlu0 %v1237
  %v1239 = vpop.xlane.xlu0 %1238
  %v1240 = vmul.f32 %v1239, 0.0078125
  %v1241 = vsub.f32 %v1237, %v1240
  %v1242 = vmul.f32 %v1241, %v1241
  %1243 = vadd.xlane.f32.xlu0 %v1242
  %v1244 = vpop.xlane.xlu0 %1243
  %v1245 = vmul.f32 %v1244, 0.0078125
  %v1246 = vadd.f32 %v1245, 1e-05
  %v1247 = vrsqrt.pop %v1246
  %v1248 = vmul.f32 %v1241, %v1247
  %1249 = vset.pattern.permute.xlu0 4
  %1250 = vperm.xlu0 %1249, %v30
  %v1251 = vpop.permute.xlu0 %1250
  %v1253 = vmul.f32 %v1248, %v1251
  %1254 = vset.pattern.permute.xlu0 5
  %1255 = vperm.xlu0 %1254, %v30
  %v1256 = vpop.permute.xlu0 %1255
  %v1258 = vadd.f32 %v1253, %v1256
  %vm1259 = vcmp.gt.f32.partialorder %v1258, 0.0
  %v1260 = vmin.f32 %v1258, 0.0
  %v1261 = vmul.f32 %v1260, 1.442695
  %v1262 = vpow.pop %v1261
  %v1263 = vsub.f32 %v1262, 1.0
  %v1264 = vsel %vm1259, %v1258, %v1263
  %v1265 = vld [vmem:[%s5] sm:$0xf]
  %v1266 = vld [vmem:[%s5 + $0x4] sm:$0xf]
  %v1267 = vld [vmem:[%s5 + $0x8] sm:$0xf]
  %v1268 = vld [vmem:[%s5 + $0xc] sm:$0xf]
  %v1269 = vpack.c.bf16 %v1264, %v1264
  %v1270 = vld [vmem:[%s6] sm:$0xf]
  %v1271 = vld [vmem:[%s6 + $0x4] sm:$0xf]
  %v1272 = vld [vmem:[%s6 + $0x8] sm:$0xf]
  %v1273 = vld [vmem:[%s6 + $0xc] sm:$0xf]
  %v1278 = vunpack.c.l.b16 %v1270
  %v1279 = vunpack.c.l.b16 %v1271
  %v1280 = vunpack.c.l.b16 %v1272
  %v1281 = vunpack.c.l.b16 %v1273
  %v1282 = vpack.c.b16 %v1279, %v1278
  %v1283 = vpack.c.b16 %v1281, %v1280
  %v1285 = vsel %vm59, %v1282, 0
  %v1288 = vsel %vm59, %v1283, 0
  %1290 = vmatprep.subr.bf16.mxu0 0
  %1291 = vmatpush1.bf16.msra.mxu0 0
  %1292 = vmatprep.subr.bf16.mxu0 0
  %1293 = vmatpush1.bf16.msra.mxu0 0
  %1294 = vmatprep.subr.bf16.mxu0 0
  %1295 = vmatpush1.bf16.msra.mxu0 0
  %1296 = vmatprep.subr.bf16.mxu0 0
  %1297 = vmatpush1.bf16.msra.mxu0 0
  %1298 = vmatprep.subr.bf16.mxu0 0
  %1299 = vmatpush1.bf16.msra.mxu0 0
  %1300 = vmatprep.subr.bf16.mxu0 0
  %1301 = vmatpush1.bf16.msra.mxu0 0
  %1302 = vmatprep.subr.bf16.mxu0 0
  %1303 = vmatpush1.bf16.msra.mxu0 0
  %1304 = vmatprep.subr.bf16.mxu0 0
  %1305 = vmatpush1.bf16.msra.mxu0 %v662
  %1306 = vmatprep.subr.bf16.mxu0 0
  %1307 = vmatpush2.bf16.msra.mxu0 0
  %1308 = vmatprep.subr.bf16.mxu0 0
  %1309 = vmatpush2.bf16.msra.mxu0 0
  %1310 = vmatprep.subr.bf16.mxu0 0
  %1311 = vmatpush2.bf16.msra.mxu0 0
  %1312 = vmatprep.subr.bf16.mxu0 0
  %1313 = vmatpush2.bf16.msra.mxu0 0
  %1314 = vmatprep.subr.bf16.mxu0 0
  %1315 = vmatpush2.bf16.msra.mxu0 0
  %1316 = vmatprep.subr.bf16.mxu0 0
  %1317 = vmatpush2.bf16.msra.mxu0 0
  %1318 = vmatprep.subr.bf16.mxu0 0
  %1319 = vmatpush2.bf16.msra.mxu0 0
  %1320 = vmatprep.subr.bf16.mxu0 0
  %1321 = vmatpush2.bf16.msra.mxu0 0
  %1322 = vmatprep.mubr.bf16.mxu0 0
  %1323 = vmatmul.mubr.bf16.gmra.mxu0 %v1285
  %v1324 = vpop.f32.mrf.mxu0
  %v1325 = vadd.f32 0.0, %v1324
  %v1326 = vpop.f32.mrf.mxu0
  %v1327 = vpop.f32.mrf.mxu0
  %v1328 = vadd.f32 0.0, %v1327
  %v1329 = vpop.f32.mrf.mxu0
  %1330 = vmatprep.mubr.bf16.mxu0 0
  %1331 = vmatmul.mubr.bf16.gmra.mxu0 %v1288
  %v1332 = vpop.f32.mrf.mxu0
  %v1333 = vadd.f32 0.0, %v1332
  %v1334 = vpop.f32.mrf.mxu0
  %v1335 = vpop.f32.mrf.mxu0
  %v1336 = vadd.f32 0.0, %v1335
  %v1337 = vpop.f32.mrf.mxu0
  %1338 = vdwg.mxu0
  %v1343 = vunpack.c.l.b16 %v1265
  %v1344 = vunpack.c.l.b16 %v1266
  %v1345 = vunpack.c.l.b16 %v1267
  %v1346 = vunpack.c.l.b16 %v1268
  %v1347 = vpack.c.b16 %v1344, %v1343
  %v1348 = vpack.c.b16 %v1346, %v1345
  %v1350 = vsel %vm331, %v1347, 0
  %v1353 = vsel %vm331, %v1348, 0
  %v1356 = vsel %vm335, %v1269, 0
  %1358 = vmatprep.subr.bf16.mxu0 0
  %1359 = vmatpush1.bf16.msra.mxu0 0
  %1360 = vmatprep.subr.bf16.mxu0 0
  %1361 = vmatpush1.bf16.msra.mxu0 0
  %1362 = vmatprep.subr.bf16.mxu0 0
  %1363 = vmatpush1.bf16.msra.mxu0 0
  %1364 = vmatprep.subr.bf16.mxu0 0
  %1365 = vmatpush1.bf16.msra.mxu0 0
  %1366 = vmatprep.subr.bf16.mxu0 0
  %1367 = vmatpush1.bf16.msra.mxu0 0
  %1368 = vmatprep.subr.bf16.mxu0 0
  %1369 = vmatpush1.bf16.msra.mxu0 0
  %1370 = vmatprep.subr.bf16.mxu0 0
  %1371 = vmatpush1.bf16.msra.mxu0 0
  %1372 = vmatprep.subr.bf16.mxu0 0
  %1373 = vmatpush1.bf16.msra.mxu0 %v1356
  %1374 = vmatprep.subr.bf16.mxu0 0
  %1375 = vmatpush2.bf16.msra.mxu0 0
  %1376 = vmatprep.subr.bf16.mxu0 0
  %1377 = vmatpush2.bf16.msra.mxu0 0
  %1378 = vmatprep.subr.bf16.mxu0 0
  %1379 = vmatpush2.bf16.msra.mxu0 0
  %1380 = vmatprep.subr.bf16.mxu0 0
  %1381 = vmatpush2.bf16.msra.mxu0 0
  %1382 = vmatprep.subr.bf16.mxu0 0
  %1383 = vmatpush2.bf16.msra.mxu0 0
  %1384 = vmatprep.subr.bf16.mxu0 0
  %1385 = vmatpush2.bf16.msra.mxu0 0
  %1386 = vmatprep.subr.bf16.mxu0 0
  %1387 = vmatpush2.bf16.msra.mxu0 0
  %1388 = vmatprep.subr.bf16.mxu0 0
  %1389 = vmatpush2.bf16.msra.mxu0 0
  %1390 = vmatprep.mubr.bf16.mxu0 0
  %1391 = vmatmul.mubr.bf16.gmra.mxu0 %v1350
  %v1392 = vpop.f32.mrf.mxu0
  %v1393 = vadd.f32 %v1325, %v1392
  %v1394 = vpop.f32.mrf.mxu0
  %v1395 = vpop.f32.mrf.mxu0
  %v1396 = vadd.f32 %v1328, %v1395
  %v1397 = vpop.f32.mrf.mxu0
  %1398 = vmatprep.mubr.bf16.mxu0 0
  %1399 = vmatmul.mubr.bf16.gmra.mxu0 %v1353
  %v1400 = vpop.f32.mrf.mxu0
  %v1401 = vadd.f32 %v1333, %v1400
  %v1402 = vpop.f32.mrf.mxu0
  %v1403 = vpop.f32.mrf.mxu0
  %v1404 = vadd.f32 %v1336, %v1403
  %v1405 = vpop.f32.mrf.mxu0
  %1406 = vdwg.mxu0
  %1407 = vset.pattern.permute.xlu0 6
  %1408 = vperm.xlu0 %1407, %v30
  %v1409 = vpop.permute.xlu0 %1408
  %1412 = vset.pattern.permute.xlu0 6
  %1413 = vperm.xlu0 %1412, %v31
  %v1414 = vpop.permute.xlu0 %1413
  %1417 = vset.pattern.permute.xlu0 6
  %1418 = vperm.xlu0 %1417, %v32
  %v1419 = vpop.permute.xlu0 %1418
  %1422 = vset.pattern.permute.xlu0 6
  %1423 = vperm.xlu0 %1422, %v33
  %v1424 = vpop.permute.xlu0 %1423
  %v1426 = vadd.f32 %v1393, %v1409
  %v1427 = vadd.f32 %v1396, %v1414
  %v1428 = vadd.f32 %v1401, %v1419
  %v1429 = vadd.f32 %v1404, %v1424
  %1430 = vadd.xlane.f32.xlu0 %v1426
  %v1431 = vpop.xlane.xlu0 %1430
  %1432 = vadd.xlane.f32.xlu0 %v1427
  %v1433 = vpop.xlane.xlu0 %1432
  %1434 = vadd.xlane.f32.xlu0 %v1428
  %v1435 = vpop.xlane.xlu0 %1434
  %1436 = vadd.xlane.f32.xlu0 %v1429
  %v1437 = vpop.xlane.xlu0 %1436
  %v1438 = vmul.f32 %v1431, 0.0078125
  %v1439 = vmul.f32 %v1433, 0.0078125
  %v1440 = vmul.f32 %v1435, 0.0078125
  %v1441 = vmul.f32 %v1437, 0.0078125
  %v1442 = vsub.f32 %v1426, %v1438
  %v1443 = vsub.f32 %v1427, %v1439
  %v1444 = vsub.f32 %v1428, %v1440
  %v1445 = vsub.f32 %v1429, %v1441
  %v1446 = vmul.f32 %v1442, %v1442
  %v1447 = vmul.f32 %v1443, %v1443
  %v1448 = vmul.f32 %v1444, %v1444
  %v1449 = vmul.f32 %v1445, %v1445
  %1450 = vadd.xlane.f32.xlu0 %v1446
  %v1451 = vpop.xlane.xlu0 %1450
  %1452 = vadd.xlane.f32.xlu0 %v1447
  %v1453 = vpop.xlane.xlu0 %1452
  %1454 = vadd.xlane.f32.xlu0 %v1448
  %v1455 = vpop.xlane.xlu0 %1454
  %1456 = vadd.xlane.f32.xlu0 %v1449
  %v1457 = vpop.xlane.xlu0 %1456
  %v1458 = vmul.f32 %v1451, 0.0078125
  %v1459 = vmul.f32 %v1453, 0.0078125
  %v1460 = vmul.f32 %v1455, 0.0078125
  %v1461 = vmul.f32 %v1457, 0.0078125
  %v1462 = vadd.f32 %v1458, 1e-05
  %v1463 = vadd.f32 %v1459, 1e-05
  %v1464 = vadd.f32 %v1460, 1e-05
  %v1465 = vadd.f32 %v1461, 1e-05
  %v1466 = vrsqrt.pop %v1462
  %v1467 = vrsqrt.pop %v1463
  %v1468 = vrsqrt.pop %v1464
  %v1469 = vrsqrt.pop %v1465
  %v1470 = vmul.f32 %v1442, %v1466
  %v1471 = vmul.f32 %v1443, %v1467
  %v1472 = vmul.f32 %v1444, %v1468
  %v1473 = vmul.f32 %v1445, %v1469
  %1474 = vset.pattern.permute.xlu0 7
  %1475 = vperm.xlu0 %1474, %v30
  %v1476 = vpop.permute.xlu0 %1475
  %1478 = vset.pattern.permute.xlu0 7
  %1479 = vperm.xlu0 %1478, %v31
  %v1480 = vpop.permute.xlu0 %1479
  %1482 = vset.pattern.permute.xlu0 7
  %1483 = vperm.xlu0 %1482, %v32
  %v1484 = vpop.permute.xlu0 %1483
  %1486 = vset.pattern.permute.xlu0 7
  %1487 = vperm.xlu0 %1486, %v33
  %v1488 = vpop.permute.xlu0 %1487
  %v1490 = vmul.f32 %v1470, %v1476
  %v1491 = vmul.f32 %v1471, %v1480
  %v1492 = vmul.f32 %v1472, %v1484
  %v1493 = vmul.f32 %v1473, %v1488
  %1494 = vset.pattern.permute.xlu0 8
  %1495 = vperm.xlu0 %1494, %v30
  %v1496 = vpop.permute.xlu0 %1495
  %1498 = vset.pattern.permute.xlu0 8
  %1499 = vperm.xlu0 %1498, %v31
  %v1500 = vpop.permute.xlu0 %1499
  %1502 = vset.pattern.permute.xlu0 8
  %1503 = vperm.xlu0 %1502, %v32
  %v1504 = vpop.permute.xlu0 %1503
  %1506 = vset.pattern.permute.xlu0 8
  %1507 = vperm.xlu0 %1506, %v33
  %v1508 = vpop.permute.xlu0 %1507
  %v1510 = vadd.f32 %v1490, %v1496
  %v1511 = vadd.f32 %v1491, %v1500
  %v1512 = vadd.f32 %v1492, %v1504
  %v1513 = vadd.f32 %v1493, %v1508
  %vm1514 = vcmp.gt.f32.partialorder %v1510, 0.0
  %vm1515 = vcmp.gt.f32.partialorder %v1511, 0.0
  %vm1516 = vcmp.gt.f32.partialorder %v1512, 0.0
  %vm1517 = vcmp.gt.f32.partialorder %v1513, 0.0
  %v1518 = vmin.f32 %v1510, 0.0
  %v1519 = vmin.f32 %v1511, 0.0
  %v1520 = vmin.f32 %v1512, 0.0
  %v1521 = vmin.f32 %v1513, 0.0
  %v1522 = vmul.f32 %v1518, 1.442695
  %v1523 = vpow.pop %v1522
  %v1524 = vmul.f32 %v1519, 1.442695
  %v1525 = vpow.pop %v1524
  %v1526 = vmul.f32 %v1520, 1.442695
  %v1527 = vpow.pop %v1526
  %v1528 = vmul.f32 %v1521, 1.442695
  %v1529 = vpow.pop %v1528
  %v1530 = vsub.f32 %v1523, 1.0
  %v1531 = vsub.f32 %v1525, 1.0
  %v1532 = vsub.f32 %v1527, 1.0
  %v1533 = vsub.f32 %v1529, 1.0
  %v1534 = vsel %vm1514, %v1510, %v1530
  %v1535 = vsel %vm1515, %v1511, %v1531
  %v1536 = vsel %vm1516, %v1512, %v1532
  %v1537 = vsel %vm1517, %v1513, %v1533
  %1538 = vst [vmem:[%s8] sm:$0xff] %v1534
  %1539 = vst [vmem:[%s8 + $0x8] sm:$0xff] %v1535
  %1540 = vst [vmem:[%s8 + $0x10] sm:$0xff] %v1536
  %1541 = vst [vmem:[%s8 + $0x18] sm:$0xff] %v1537
  // Predicated region
  $region34: #{resconv_forward.1} parent=0 // pred_check
    _
  $region35: #{resconv_forward.1} parent=0 // pred_check_branch
    %1543 = sbr.rel (0) target = $region37
  $region36: #{resconv_forward.1} parent=0 // pred_region
    _
  $region37: #{resconv_forward.1} parent=0 // pred_fallthru
    _
  // Predicated region
  $region38: #{resconv_forward.1} parent=0 // pred_check
    _
  $region39: #{resconv_forward.1} parent=0 // pred_check_branch
    %1545 = sbr.rel (0) target = $region41
  $region40: #{resconv_forward.1} parent=0 // pred_region
    _
  $region41: #{resconv_forward.1} parent=0 // pred_fallthru
    _

</llo_original>
